<compile_context>
chip_gen: v7x
topology: tpu7x:2x2x1
jax: 0.10.0
libtpu: 0.0.40
codegen_flags: <defaults>
</compile_context>

<pallas_src>
import jax
import jax.numpy as jnp
from jax.experimental import pallas as pl
from jax.experimental.pallas import tpu as pltpu

MAX_TILE_B = 256   # rows per grid step (multiple of 8; fills MXU M on all gens)
OUT_PAD = 128      # fc4 output padded to one full lane width for dense stores


def mlp_kernel(a_ref,                       # (3,) PReLU scalars in SMEM
               x_ref,                       # (TILE_B, D) bf16
               w1_ref, b1_ref,
               w2_ref, b2_ref,
               w3_ref, b3_ref,
               w4_ref, b4_ref,
               o_ref):                      # (TILE_B, OUT_PAD) f32
    """Fused 4-layer MLP with shared-scalar PReLU activations.

    Matmuls run on the MXU in bf16 with f32 accumulation; bias adds and PReLU
    happen in f32; activations are re-cast to bf16 before the next matmul.
    """
    def prelu(h, a):
        # a is a scalar read from SMEM (scalar path, no vector load).
        return jnp.where(h >= 0, h, a * h)

    x = x_ref[...]

    # fc1 + PReLU  (dropout1 == identity at inference)
    h = jnp.dot(x, w1_ref[...], preferred_element_type=jnp.float32) + b1_ref[...]
    h = prelu(h, a_ref[0]).astype(jnp.bfloat16)

    # fc2 + PReLU  (dropout2 == identity at inference)
    h = jnp.dot(h, w2_ref[...], preferred_element_type=jnp.float32) + b2_ref[...]
    h = prelu(h, a_ref[1]).astype(jnp.bfloat16)

    # fc3 + PReLU  (dropout3 == identity at inference)
    h = jnp.dot(h, w3_ref[...], preferred_element_type=jnp.float32) + b3_ref[...]
    h = prelu(h, a_ref[2]).astype(jnp.bfloat16)

    # fc4 (no activation; output columns zero-padded to OUT_PAD -> lane-dense store)
    out = jnp.dot(h, w4_ref[...], preferred_element_type=jnp.float32) + b4_ref[...]
    o_ref[...] = out.astype(o_ref.dtype)


def mlp_forward(x, params):
    """x: (B, data_dim) f32.  params: dict of weights/biases/prelu scalars.

    Returns (B, 1) f32, matching the PyTorch module's forward().
    """
    B, D = x.shape

    # Adapt the batch tile: at least 8 (sublane), at most MAX_TILE_B.
    tile_b = min(MAX_TILE_B, max(8, ((B + 7) // 8) * 8))
    padded_B = ((B + tile_b - 1) // tile_b) * tile_b

    x_bf = x.astype(jnp.bfloat16)
    if padded_B != B:
        x_bf = jnp.pad(x_bf, ((0, padded_B - B), (0, 0)))

    # bf16 weights for the MXU; biases stay f32 (added to f32 accumulators).
    w1 = params["w1"].astype(jnp.bfloat16)
    w2 = params["w2"].astype(jnp.bfloat16)
    w3 = params["w3"].astype(jnp.bfloat16)
    # Pad fc4 to OUT_PAD output columns (zeros) so the output store is lane-dense.
    w4 = jnp.pad(params["w4"], ((0, 0), (0, OUT_PAD - params["w4"].shape[1])))
    w4 = w4.astype(jnp.bfloat16)
    b4 = jnp.pad(params["b4"], ((0, 0), (0, OUT_PAD - params["b4"].shape[1])))

    # Pack the three shared PReLU scalars into one SMEM array.
    prelu_a = jnp.concatenate(
        [params["a1"], params["a2"], params["a3"]]).astype(jnp.float32)

    args = (
        prelu_a,
        x_bf,
        w1, params["b1"],
        w2, params["b2"],
        w3, params["b3"],
        w4, b4,
    )

    in_specs = [
        pl.BlockSpec(memory_space=pltpu.MemorySpace.SMEM),   # PReLU scalars
        pl.BlockSpec((tile_b, D), lambda i: (i, 0)),         # x tile (pipelined)
        pl.BlockSpec((D, 512),    lambda i: (0, 0)),         # w1 (resident)
        pl.BlockSpec((1, 512),    lambda i: (0, 0)),         # b1
        pl.BlockSpec((512, 512),  lambda i: (0, 0)),         # w2
        pl.BlockSpec((1, 512),    lambda i: (0, 0)),         # b2
        pl.BlockSpec((512, 256),  lambda i: (0, 0)),         # w3
        pl.BlockSpec((1, 256),    lambda i: (0, 0)),         # b3
        pl.BlockSpec((256, OUT_PAD), lambda i: (0, 0)),      # w4 (padded)
        pl.BlockSpec((1, OUT_PAD),   lambda i: (0, 0)),      # b4 (padded)
    ]
    out_spec = pl.BlockSpec((tile_b, OUT_PAD), lambda i: (i, 0))

    out_padded = pl.pallas_call(
        mlp_kernel,
        out_shape=jax.ShapeDtypeStruct((padded_B, OUT_PAD), jnp.float32),
        grid=(padded_B // tile_b,),
        in_specs=in_specs,
        out_specs=out_spec,
        compiler_params=pltpu.CompilerParams(
            dimension_semantics=("parallel",)),
    )(*args)

    return out_padded[:B, :1]


def init_params(key, data_dim):
    """Deterministic synthetic init matching the PyTorch module's shapes.
    Weights are stored as (in, out) == PyTorch weight.T."""
    ks = jax.random.split(key, 8)

    def lin(kw, kb, fan_in, fan_out):
        bound = 1.0 / jnp.sqrt(fan_in)
        w = jax.random.uniform(kw, (fan_in, fan_out), jnp.float32, -bound, bound)
        b = jax.random.uniform(kb, (1, fan_out), jnp.float32, -bound, bound)
        return w, b

    w1, b1 = lin(ks[0], ks[1], data_dim, 512)
    w2, b2 = lin(ks[2], ks[3], 512, 512)
    w3, b3 = lin(ks[4], ks[5], 512, 256)
    w4, b4 = lin(ks[6], ks[7], 256, 1)
    # nn.PReLU() default: a single shared parameter per layer, initialized to 0.25.
    # Kept as three SEPARATE (1,) arrays so trained weights can differ per layer.
    a1 = jnp.full((1,), 0.25, jnp.float32)
    a2 = jnp.full((1,), 0.25, jnp.float32)
    a3 = jnp.full((1,), 0.25, jnp.float32)
    return {
        "w1": w1, "b1": b1, "a1": a1,
        "w2": w2, "b2": b2, "a2": a2,
        "w3": w3, "b3": b3, "a3": a3,
        "w4": w4, "b4": b4,
    }


def mlp_reference(x, p):
    """Pure-JAX reference mirroring the kernel's dtype behavior (bf16 matmuls,
    f32 accumulation / bias / PReLU)."""
    def prelu(h, a):
        return jnp.where(h >= 0, h, a[0] * h)

    xb = x.astype(jnp.bfloat16)
    h = jnp.dot(xb, p["w1"].astype(jnp.bfloat16),
                preferred_element_type=jnp.float32) + p["b1"]
    h = prelu(h, p["a1"]).astype(jnp.bfloat16)
    h = jnp.dot(h, p["w2"].astype(jnp.bfloat16),
                preferred_element_type=jnp.float32) + p["b2"]
    h = prelu(h, p["a2"]).astype(jnp.bfloat16)
    h = jnp.dot(h, p["w3"].astype(jnp.bfloat16),
                preferred_element_type=jnp.float32) + p["b3"]
    h = prelu(h, p["a3"]).astype(jnp.bfloat16)
    return jnp.dot(h, p["w4"].astype(jnp.bfloat16),
                   preferred_element_type=jnp.float32) + p["b4"]


if __name__ == "__main__":
    key = jax.random.PRNGKey(0)
    k_x, k_p = jax.random.split(key)

    B, data_dim = 8, 32
    x = jax.random.normal(k_x, (B, data_dim), jnp.float32)
    params = init_params(k_p, data_dim)

    out = mlp_forward(x, params)
    out = jax.block_until_ready(out)

    ref = mlp_reference(x, params)
    assert out.shape == (B, 1)
    assert jnp.allclose(out, ref, atol=1e-2, rtol=1e-2), "mismatch vs. JAX reference"

    print("KERNEL_OK")
</pallas_src>

<mosaic_0001>
module attributes {stable_mosaic.version = 11 : i64} {
  func.func @mlp_kernel(%arg0: i32, %arg1: memref<3xf32, #tpu.memory_space<smem>>, %arg2: memref<8x32xbf16, #tpu.memory_space<vmem>>, %arg3: memref<32x512xbf16, #tpu.memory_space<vmem>>, %arg4: memref<1x512xf32, #tpu.memory_space<vmem>>, %arg5: memref<512x512xbf16, #tpu.memory_space<vmem>>, %arg6: memref<1x512xf32, #tpu.memory_space<vmem>>, %arg7: memref<512x256xbf16, #tpu.memory_space<vmem>>, %arg8: memref<1x256xf32, #tpu.memory_space<vmem>>, %arg9: memref<256x128xbf16, #tpu.memory_space<vmem>>, %arg10: memref<1x128xf32, #tpu.memory_space<vmem>>, %arg11: memref<8x128xf32, #tpu.memory_space<vmem>>) attributes {dimension_semantics = [#tpu.dimension_semantics<parallel>], iteration_bounds = array<i64: 1>, scalar_prefetch = 0 : i64, scratch_operands = 0 : i64, tpu.core_type = #tpu.core_type<tc>, window_params = [{transform_indices = @transform_0, window_bounds = array<i64: 3>}, {transform_indices = @transform_1, window_bounds = array<i64: 8, 32>}, {pipeline_mode = #tpu.pipeline_mode<synchronous>, transform_indices = @transform_2, window_bounds = array<i64: 32, 512>}, {pipeline_mode = #tpu.pipeline_mode<synchronous>, transform_indices = @transform_3, window_bounds = array<i64: 1, 512>}, {pipeline_mode = #tpu.pipeline_mode<synchronous>, transform_indices = @transform_4, window_bounds = array<i64: 512, 512>}, {pipeline_mode = #tpu.pipeline_mode<synchronous>, transform_indices = @transform_5, window_bounds = array<i64: 1, 512>}, {pipeline_mode = #tpu.pipeline_mode<synchronous>, transform_indices = @transform_6, window_bounds = array<i64: 512, 256>}, {pipeline_mode = #tpu.pipeline_mode<synchronous>, transform_indices = @transform_7, window_bounds = array<i64: 1, 256>}, {pipeline_mode = #tpu.pipeline_mode<synchronous>, transform_indices = @transform_8, window_bounds = array<i64: 256, 128>}, {pipeline_mode = #tpu.pipeline_mode<synchronous>, transform_indices = @transform_9, window_bounds = array<i64: 1, 128>}, {transform_indices = @transform_10, window_bounds = array<i64: 8, 128>}]} {
    %c0 = arith.constant 0 : index
    %c0_0 = arith.constant 0 : index
    %0 = vector.load %arg2[%c0, %c0_0] : memref<8x32xbf16, #tpu.memory_space<vmem>>, vector<8x32xbf16>
    %c0_1 = arith.constant 0 : index
    %c0_2 = arith.constant 0 : index
    %1 = vector.load %arg3[%c0_1, %c0_2] : memref<32x512xbf16, #tpu.memory_space<vmem>>, vector<32x512xbf16>
    %cst = arith.constant dense<0.000000e+00> : vector<8x512xf32>
    %2 = tpu.matmul %0, %1, %cst {dimension_numbers = #tpu.dot_dimension_numbers<[1], [0], [0], [1], [0, 0, 1, 1], [], []>} : vector<8x32xbf16>, vector<32x512xbf16>, vector<8x512xf32> -> vector<8x512xf32>
    %c0_3 = arith.constant 0 : index
    %c0_4 = arith.constant 0 : index
    %3 = vector.load %arg4[%c0_3, %c0_4] : memref<1x512xf32, #tpu.memory_space<vmem>>, vector<1x512xf32>
    %4 = vector.broadcast %3 : vector<1x512xf32> to vector<8x512xf32>
    %5 = arith.addf %2, %4 : vector<8x512xf32>
    %c0_5 = arith.constant 0 : index
    %6 = memref.load %arg1[%c0_5] : memref<3xf32, #tpu.memory_space<smem>>
    %cst_6 = arith.constant 0.000000e+00 : f32
    %7 = vector.broadcast %cst_6 : f32 to vector<8x512xf32>
    %8 = arith.cmpf oge, %5, %7 : vector<8x512xf32>
    %9 = vector.broadcast %6 : f32 to vector<8x512xf32>
    %10 = arith.mulf %9, %5 : vector<8x512xf32>
    %11 = arith.select %8, %5, %10 : vector<8x512xi1>, vector<8x512xf32>
    %12 = arith.truncf %11 : vector<8x512xf32> to vector<8x512xbf16>
    %c0_7 = arith.constant 0 : index
    %c0_8 = arith.constant 0 : index
    %13 = vector.load %arg5[%c0_7, %c0_8] : memref<512x512xbf16, #tpu.memory_space<vmem>>, vector<512x512xbf16>
    %cst_9 = arith.constant dense<0.000000e+00> : vector<8x512xf32>
    %14 = tpu.matmul %12, %13, %cst_9 {dimension_numbers = #tpu.dot_dimension_numbers<[1], [0], [0], [1], [0, 0, 1, 1], [], []>} : vector<8x512xbf16>, vector<512x512xbf16>, vector<8x512xf32> -> vector<8x512xf32>
    %c0_10 = arith.constant 0 : index
    %c0_11 = arith.constant 0 : index
    %15 = vector.load %arg6[%c0_10, %c0_11] : memref<1x512xf32, #tpu.memory_space<vmem>>, vector<1x512xf32>
    %16 = vector.broadcast %15 : vector<1x512xf32> to vector<8x512xf32>
    %17 = arith.addf %14, %16 : vector<8x512xf32>
    %c1 = arith.constant 1 : index
    %18 = memref.load %arg1[%c1] : memref<3xf32, #tpu.memory_space<smem>>
    %cst_12 = arith.constant 0.000000e+00 : f32
    %19 = vector.broadcast %cst_12 : f32 to vector<8x512xf32>
    %20 = arith.cmpf oge, %17, %19 : vector<8x512xf32>
    %21 = vector.broadcast %18 : f32 to vector<8x512xf32>
    %22 = arith.mulf %21, %17 : vector<8x512xf32>
    %23 = arith.select %20, %17, %22 : vector<8x512xi1>, vector<8x512xf32>
    %24 = arith.truncf %23 : vector<8x512xf32> to vector<8x512xbf16>
    %c0_13 = arith.constant 0 : index
    %c0_14 = arith.constant 0 : index
    %25 = vector.load %arg7[%c0_13, %c0_14] : memref<512x256xbf16, #tpu.memory_space<vmem>>, vector<512x256xbf16>
    %cst_15 = arith.constant dense<0.000000e+00> : vector<8x256xf32>
    %26 = tpu.matmul %24, %25, %cst_15 {dimension_numbers = #tpu.dot_dimension_numbers<[1], [0], [0], [1], [0, 0, 1, 1], [], []>} : vector<8x512xbf16>, vector<512x256xbf16>, vector<8x256xf32> -> vector<8x256xf32>
    %c0_16 = arith.constant 0 : index
    %c0_17 = arith.constant 0 : index
    %27 = vector.load %arg8[%c0_16, %c0_17] : memref<1x256xf32, #tpu.memory_space<vmem>>, vector<1x256xf32>
    %28 = vector.broadcast %27 : vector<1x256xf32> to vector<8x256xf32>
    %29 = arith.addf %26, %28 : vector<8x256xf32>
    %c2 = arith.constant 2 : index
    %30 = memref.load %arg1[%c2] : memref<3xf32, #tpu.memory_space<smem>>
    %cst_18 = arith.constant 0.000000e+00 : f32
    %31 = vector.broadcast %cst_18 : f32 to vector<8x256xf32>
    %32 = arith.cmpf oge, %29, %31 : vector<8x256xf32>
    %33 = vector.broadcast %30 : f32 to vector<8x256xf32>
    %34 = arith.mulf %33, %29 : vector<8x256xf32>
    %35 = arith.select %32, %29, %34 : vector<8x256xi1>, vector<8x256xf32>
    %36 = arith.truncf %35 : vector<8x256xf32> to vector<8x256xbf16>
    %c0_19 = arith.constant 0 : index
    %c0_20 = arith.constant 0 : index
    %37 = vector.load %arg9[%c0_19, %c0_20] : memref<256x128xbf16, #tpu.memory_space<vmem>>, vector<256x128xbf16>
    %cst_21 = arith.constant dense<0.000000e+00> : vector<8x128xf32>
    %38 = tpu.matmul %36, %37, %cst_21 {dimension_numbers = #tpu.dot_dimension_numbers<[1], [0], [0], [1], [0, 0, 1, 1], [], []>} : vector<8x256xbf16>, vector<256x128xbf16>, vector<8x128xf32> -> vector<8x128xf32>
    %c0_22 = arith.constant 0 : index
    %c0_23 = arith.constant 0 : index
    %39 = vector.load %arg10[%c0_22, %c0_23] : memref<1x128xf32, #tpu.memory_space<vmem>>, vector<1x128xf32>
    %40 = vector.broadcast %39 : vector<1x128xf32> to vector<8x128xf32>
    %41 = arith.addf %38, %40 : vector<8x128xf32>
    %c0_24 = arith.constant 0 : index
    %c0_25 = arith.constant 0 : index
    %42 = vector.load %arg11[%c0_24, %c0_25] : memref<8x128xf32, #tpu.memory_space<vmem>>, vector<8x128xf32>
    tpu.vector_store %arg11[%c0_24, %c0_25], %41 {strides = array<i32>} : memref<8x128xf32, #tpu.memory_space<vmem>>, vector<8x128xf32>,
    return
  }
  func.func @transform_0(%arg0: i32) -> i32 {
    %c0_i32 = arith.constant 0 : i32
    %c0_i32_0 = arith.constant 0 : i32
    return %c0_i32 : i32
  }
  func.func @transform_1(%arg0: i32) -> (i32, i32) {
    %c0_i32 = arith.constant 0 : i32
    %c0_i32_0 = arith.constant 0 : i32
    return %arg0, %c0_i32 : i32, i32
  }
  func.func @transform_2(%arg0: i32) -> (i32, i32) {
    %c0_i32 = arith.constant 0 : i32
    %c0_i32_0 = arith.constant 0 : i32
    %c0_i32_1 = arith.constant 0 : i32
    return %c0_i32, %c0_i32_0 : i32, i32
  }
  func.func @transform_3(%arg0: i32) -> (i32, i32) {
    %c0_i32 = arith.constant 0 : i32
    %c0_i32_0 = arith.constant 0 : i32
    %c0_i32_1 = arith.constant 0 : i32
    return %c0_i32, %c0_i32_0 : i32, i32
  }
  func.func @transform_4(%arg0: i32) -> (i32, i32) {
    %c0_i32 = arith.constant 0 : i32
    %c0_i32_0 = arith.constant 0 : i32
    %c0_i32_1 = arith.constant 0 : i32
    return %c0_i32, %c0_i32_0 : i32, i32
  }
  func.func @transform_5(%arg0: i32) -> (i32, i32) {
    %c0_i32 = arith.constant 0 : i32
    %c0_i32_0 = arith.constant 0 : i32
    %c0_i32_1 = arith.constant 0 : i32
    return %c0_i32, %c0_i32_0 : i32, i32
  }
  func.func @transform_6(%arg0: i32) -> (i32, i32) {
    %c0_i32 = arith.constant 0 : i32
    %c0_i32_0 = arith.constant 0 : i32
    %c0_i32_1 = arith.constant 0 : i32
    return %c0_i32, %c0_i32_0 : i32, i32
  }
  func.func @transform_7(%arg0: i32) -> (i32, i32) {
    %c0_i32 = arith.constant 0 : i32
    %c0_i32_0 = arith.constant 0 : i32
    %c0_i32_1 = arith.constant 0 : i32
    return %c0_i32, %c0_i32_0 : i32, i32
  }
  func.func @transform_8(%arg0: i32) -> (i32, i32) {
    %c0_i32 = arith.constant 0 : i32
    %c0_i32_0 = arith.constant 0 : i32
    %c0_i32_1 = arith.constant 0 : i32
    return %c0_i32, %c0_i32_0 : i32, i32
  }
  func.func @transform_9(%arg0: i32) -> (i32, i32) {
    %c0_i32 = arith.constant 0 : i32
    %c0_i32_0 = arith.constant 0 : i32
    %c0_i32_1 = arith.constant 0 : i32
    return %c0_i32, %c0_i32_0 : i32, i32
  }
  func.func @transform_10(%arg0: i32) -> (i32, i32) {
    %c0_i32 = arith.constant 0 : i32
    %c0_i32_0 = arith.constant 0 : i32
    return %arg0, %c0_i32 : i32, i32
  }
}

</mosaic_0001>

<llo_original>
// kernel: tpu_custom_call.1
$region0: #{tpu_custom_call.1}
  #allocation0 [shape = 'u32[]', space=smem, size = 0x4, offset = 0x4, fixed_abs, tag = 'smem constant byte address 0x4 - core index']
  #allocation1 [shape = 'u32[144,128]{1,0:T(1,128)}', space=vmem, size = 0x12000, scoped, tag = 'internal scratch']
  %s0 = inlined_call_operand.hbm [shape: f32[3], index: 0, kind: input, shape index: {}]
  %s1 = inlined_call_operand.hbm [shape: bf16[8,32], index: 1, kind: input, shape index: {}]
  %s2 = inlined_call_operand.hbm [shape: bf16[32,512], index: 2, kind: input, shape index: {}]
  %s3 = inlined_call_operand.vmem [shape: f32[1,512], index: 3, kind: input, shape index: {}]
  %s4 = inlined_call_operand.hbm [shape: bf16[512,512], index: 4, kind: input, shape index: {}]
  %s5 = inlined_call_operand.vmem [shape: f32[1,512], index: 5, kind: input, shape index: {}]
  %s6 = inlined_call_operand.hbm [shape: bf16[512,256], index: 6, kind: input, shape index: {}]
  %s7 = inlined_call_operand.vmem [shape: f32[1,256], index: 7, kind: input, shape index: {}]
  %s8 = inlined_call_operand.hbm [shape: bf16[256,128], index: 8, kind: input, shape index: {}]
  %s9 = inlined_call_operand.vmem [shape: f32[1,128], index: 9, kind: input, shape index: {}]
  %s10 = inlined_call_operand.hbm [shape: f32[8,128], index: 10, kind: output, shape index: {}]
  %s11 = sld [smem:[#allocation0]]
  $region74: #{tpu_custom_call.1} parent=0
    _
  %s13 = ssub.s32 1, %s11
  %s14 = scalar_select 0, %s13, %s11
  $region1: #{tpu_custom_call.1} parent=0
    #allocation2 [shape = 'u8[512]{0}', space=smem, size = 0x200, scoped, tag = 'input window, operand 0, single buffered']
    #allocation3 [shape = 's32[1]{0}', space=sflag, size = 0x4, scoped, tag = 'scoped memory for tpu_custom_call.1']
    #allocation4 [shape = 's32[1]{0}', space=sflag, size = 0x4, scoped, tag = 'scoped memory for tpu_custom_call.1']
    #allocation5 [shape = 's32[1]{0}', space=sflag, size = 0x4, scoped, tag = 'scoped memory for tpu_custom_call.1']
    #allocation6 [shape = 'u8[2048]{0}', space=vmem, size = 0x800, scoped, tag = 'input window, operand 1, single buffered']
    #allocation7 [shape = 'u8[32768]{0}', space=vmem, size = 0x8000, scoped, tag = 'input window, operand 2, single buffered']
    #allocation8 [shape = 's32[1]{0}', space=sflag, size = 0x4, scoped, tag = 'scoped memory for tpu_custom_call.1']
    #allocation9 [shape = 'u8[524288]{0}', space=vmem, size = 0x80000, scoped, tag = 'input window, operand 4, single buffered']
    #allocation10 [shape = 'u8[262144]{0}', space=vmem, size = 0x40000, scoped, tag = 'input window, operand 6, single buffered']
    #allocation11 [shape = 's32[1]{0}', space=sflag, size = 0x4, scoped, tag = 'scoped memory for tpu_custom_call.1']
    #allocation12 [shape = 'u8[65536]{0}', space=vmem, size = 0x10000, scoped, tag = 'input window, operand 8, single buffered']
    #allocation13 [shape = 'u8[4096]{0}', space=vmem, size = 0x1000, scoped, tag = 'output window, operand 0, single buffered']
    %15 = vsyncpa [#allocation5], 0
    %16 = vsyncpa [#allocation3], 0
    %17 = vsyncpa [#allocation8], 0
    %18 = vsyncpa [#allocation11], 0
    %19 = vsyncpa [#allocation4], 0
    // Predicated region
    $region2: #{tpu_custom_call.1} parent=1 // pred_check
      _
    $region3: #{tpu_custom_call.1} parent=1 // pred_check_branch
      %21 = sbr.rel (0) target = $region5
    $region4: #{tpu_custom_call.1} parent=1 // pred_region
      %s23 = ssub.s32 16, 16
      %24 = vsyncadd [#allocation5], %s23
      %27 = dma.hbm_to_smem %s0, 16, [#allocation2], [#allocation5]
    $region5: #{tpu_custom_call.1} parent=1 // pred_fallthru
      _
    // Predicated region
    $region6: #{tpu_custom_call.1} parent=1 // pred_check
      _
    $region7: #{tpu_custom_call.1} parent=1 // pred_check_branch
      %29 = sbr.rel (0) target = $region9
    $region8: #{tpu_custom_call.1} parent=1 // pred_region
      %s31 = ssub.s32 64, 64
      %32 = vsyncadd [#allocation3], %s31
      %s34 = sshll.u32 [#allocation6], 4
      %s35 = int_to_ptr.vmem [resolvable:$true] %s34
      %37 = dma.hbm_to_vmem [thread:$0]  %s1, 64, %s35, [#allocation3]
    $region9: #{tpu_custom_call.1} parent=1 // pred_fallthru
      _
    // Predicated region
    $region10: #{tpu_custom_call.1} parent=1 // pred_check
      _
    $region11: #{tpu_custom_call.1} parent=1 // pred_check_branch
      %39 = sbr.rel (0) target = $region13
    $region12: #{tpu_custom_call.1} parent=1 // pred_region
      %s41 = ssub.s32 1024, 1024
      %42 = vsyncadd [#allocation8], %s41
      %s43 = sshll.u32 [#allocation7], 4
      %s44 = int_to_ptr.vmem [resolvable:$true] %s43
      %49 = dma.hbm_to_vmem [thread:$0]  %s2, 1024, %s44, [#allocation8], 256, 256, 16
    $region13: #{tpu_custom_call.1} parent=1 // pred_fallthru
      _
    // Predicated region
    $region14: #{tpu_custom_call.1} parent=1 // pred_check
      _
    $region15: #{tpu_custom_call.1} parent=1 // pred_check_branch
      %51 = sbr.rel (0) target = $region17
    $region16: #{tpu_custom_call.1} parent=1 // pred_region
      _
    $region17: #{tpu_custom_call.1} parent=1 // pred_fallthru
      _
    // Predicated region
    $region18: #{tpu_custom_call.1} parent=1 // pred_check
      _
    $region19: #{tpu_custom_call.1} parent=1 // pred_check_branch
      %53 = sbr.rel (0) target = $region21
    $region20: #{tpu_custom_call.1} parent=1 // pred_region
      %s55 = ssub.s32 16384, 16384
      %56 = vsyncadd [#allocation8], %s55
      %s57 = sshll.u32 [#allocation9], 4
      %s58 = int_to_ptr.vmem [resolvable:$true] %s57
      %63 = dma.hbm_to_vmem [thread:$0]  %s4, 16384, %s58, [#allocation8], 256, 256, 16
    $region21: #{tpu_custom_call.1} parent=1 // pred_fallthru
      _
    // Predicated region
    $region22: #{tpu_custom_call.1} parent=1 // pred_check
      _
    $region23: #{tpu_custom_call.1} parent=1 // pred_check_branch
      %65 = sbr.rel (0) target = $region25
    $region24: #{tpu_custom_call.1} parent=1 // pred_region
      _
    $region25: #{tpu_custom_call.1} parent=1 // pred_fallthru
      _
    // Predicated region
    $region26: #{tpu_custom_call.1} parent=1 // pred_check
      _
    $region27: #{tpu_custom_call.1} parent=1 // pred_check_branch
      %67 = sbr.rel (0) target = $region29
    $region28: #{tpu_custom_call.1} parent=1 // pred_region
      %s69 = ssub.s32 8192, 8192
      %70 = vsyncadd [#allocation11], %s69
      %s71 = sshll.u32 [#allocation10], 4
      %s72 = int_to_ptr.vmem [resolvable:$true] %s71
      %77 = dma.hbm_to_vmem [thread:$0]  %s6, 8192, %s72, [#allocation11], 128, 128, 8
    $region29: #{tpu_custom_call.1} parent=1 // pred_fallthru
      _
    // Predicated region
    $region30: #{tpu_custom_call.1} parent=1 // pred_check
      _
    $region31: #{tpu_custom_call.1} parent=1 // pred_check_branch
      %79 = sbr.rel (0) target = $region33
    $region32: #{tpu_custom_call.1} parent=1 // pred_region
      _
    $region33: #{tpu_custom_call.1} parent=1 // pred_fallthru
      _
    // Predicated region
    $region34: #{tpu_custom_call.1} parent=1 // pred_check
      _
    $region35: #{tpu_custom_call.1} parent=1 // pred_check_branch
      %81 = sbr.rel (0) target = $region37
    $region36: #{tpu_custom_call.1} parent=1 // pred_region
      %s83 = ssub.s32 2048, 2048
      %84 = vsyncadd [#allocation11], %s83
      %s85 = sshll.u32 [#allocation12], 4
      %s86 = int_to_ptr.vmem [resolvable:$true] %s85
      %91 = dma.hbm_to_vmem [thread:$0]  %s8, 2048, %s86, [#allocation11], 64, 64, 4
    $region37: #{tpu_custom_call.1} parent=1 // pred_fallthru
      _
    // Predicated region
    $region38: #{tpu_custom_call.1} parent=1 // pred_check
      _
    $region39: #{tpu_custom_call.1} parent=1 // pred_check_branch
      %93 = sbr.rel (0) target = $region41
    $region40: #{tpu_custom_call.1} parent=1 // pred_region
      _
    $region41: #{tpu_custom_call.1} parent=1 // pred_fallthru
      _
    // Predicated region
    $region42: #{tpu_custom_call.1} parent=1 // pred_check
      _
    $region43: #{tpu_custom_call.1} parent=1 // pred_check_branch
      %95 = sbr.rel (0) target = $region45
    $region44: #{tpu_custom_call.1} parent=1 // pred_region
      %96 = dma.done [#allocation5], 16
    $region45: #{tpu_custom_call.1} parent=1 // pred_fallthru
      _
    // Predicated region
    $region46: #{tpu_custom_call.1} parent=1 // pred_check
      _
    $region47: #{tpu_custom_call.1} parent=1 // pred_check_branch
      %98 = sbr.rel (0) target = $region49
    $region48: #{tpu_custom_call.1} parent=1 // pred_region
      %99 = dma.done [#allocation3], 64
    $region49: #{tpu_custom_call.1} parent=1 // pred_fallthru
      _
    // Predicated region
    $region50: #{tpu_custom_call.1} parent=1 // pred_check
      _
    $region51: #{tpu_custom_call.1} parent=1 // pred_check_branch
      %101 = sbr.rel (0) target = $region53
    $region52: #{tpu_custom_call.1} parent=1 // pred_region
      %102 = dma.done [#allocation8], 1024
    $region53: #{tpu_custom_call.1} parent=1 // pred_fallthru
      _
    // Predicated region
    $region54: #{tpu_custom_call.1} parent=1 // pred_check
      _
    $region55: #{tpu_custom_call.1} parent=1 // pred_check_branch
      %104 = sbr.rel (0) target = $region57
    $region56: #{tpu_custom_call.1} parent=1 // pred_region
      %105 = dma.done [#allocation8], 16384
    $region57: #{tpu_custom_call.1} parent=1 // pred_fallthru
      _
    // Predicated region
    $region58: #{tpu_custom_call.1} parent=1 // pred_check
      _
    $region59: #{tpu_custom_call.1} parent=1 // pred_check_branch
      %107 = sbr.rel (0) target = $region61
    $region60: #{tpu_custom_call.1} parent=1 // pred_region
      %108 = dma.done [#allocation11], 8192
    $region61: #{tpu_custom_call.1} parent=1 // pred_fallthru
      _
    // Predicated region
    $region62: #{tpu_custom_call.1} parent=1 // pred_check
      _
    $region63: #{tpu_custom_call.1} parent=1 // pred_check_branch
      %110 = sbr.rel (0) target = $region65
    $region64: #{tpu_custom_call.1} parent=1 // pred_region
      %111 = dma.done [#allocation11], 2048
    $region65: #{tpu_custom_call.1} parent=1 // pred_fallthru
      _
    %112 = sfence
    %v114 = vld [vmem:[#allocation6] sm:$0xf]
    %v115 = vld [vmem:[#allocation7] sm:$0xff]
    %v116 = vld [vmem:[#allocation7 + $0x8] sm:$0xff]
    %v117 = vld [vmem:[#allocation7 + $0x10] sm:$0xff]
    %v118 = vld [vmem:[#allocation7 + $0x18] sm:$0xff]
    %v119 = vld [vmem:[#allocation7 + $0x20] sm:$0xff]
    %v120 = vld [vmem:[#allocation7 + $0x28] sm:$0xff]
    %v121 = vld [vmem:[#allocation7 + $0x30] sm:$0xff]
    %v122 = vld [vmem:[#allocation7 + $0x38] sm:$0xff]
    %v123 = vld [vmem:[%s3] sm:$0xf]
    %v125 = vlaneseq
    %v126 = vshrl.u32 %v125, 7
    %v127 = vsub.s32 0, %v126
    %v128 = vrot.slane %v123, %v127
    %v129 = vlaneseq
    %v130 = vshrl.u32 %v129, 7
    %v131 = vsub.s32 1, %v130
    %v132 = vrot.slane %v123, %v131
    %v133 = vlaneseq
    %v134 = vshrl.u32 %v133, 7
    %v135 = vsub.s32 2, %v134
    %v136 = vrot.slane %v123, %v135
    %v137 = vlaneseq
    %v138 = vshrl.u32 %v137, 7
    %v139 = vsub.s32 3, %v138
    %v140 = vrot.slane %v123, %v139
    %v153 = vunpack.c.l.b16 %v115
    %v154 = vunpack.c.h.b16 %v115
    %v155 = vunpack.c.l.b16 %v116
    %v156 = vunpack.c.h.b16 %v116
    %v157 = vunpack.c.l.b16 %v117
    %v158 = vunpack.c.h.b16 %v117
    %v159 = vunpack.c.l.b16 %v118
    %v160 = vunpack.c.h.b16 %v118
    %v161 = vunpack.c.l.b16 %v119
    %v162 = vunpack.c.h.b16 %v119
    %v163 = vunpack.c.l.b16 %v120
    %v164 = vunpack.c.h.b16 %v120
    %v165 = vunpack.c.l.b16 %v121
    %v166 = vunpack.c.h.b16 %v121
    %v167 = vunpack.c.l.b16 %v122
    %v168 = vunpack.c.h.b16 %v122
    %v169 = vpack.c.b16 %v157, %v153
    %v170 = vpack.c.b16 %v158, %v154
    %v171 = vpack.c.b16 %v159, %v155
    %v172 = vpack.c.b16 %v160, %v156
    %v173 = vpack.c.b16 %v165, %v161
    %v174 = vpack.c.b16 %v166, %v162
    %v175 = vpack.c.b16 %v167, %v163
    %v176 = vpack.c.b16 %v168, %v164
    %vm185 = vcmask 261120
    %v187 = vsel %vm185, %v114, 0
    %189 = vmatprep.subr.bf16.mxu0 %v170
    %190 = vmatpush1.bf16.msra.mxu0 %v169
    %191 = vmatprep.subr.bf16.mxu0 %v174
    %192 = vmatpush1.bf16.msra.mxu0 %v173
    %193 = vmatprep.subr.bf16.mxu0 0
    %194 = vmatpush1.bf16.msra.mxu0 0
    %195 = vmatprep.subr.bf16.mxu0 0
    %196 = vmatpush1.bf16.msra.mxu0 0
    %197 = vmatprep.subr.bf16.mxu0 0
    %198 = vmatpush1.bf16.msra.mxu0 0
    %199 = vmatprep.subr.bf16.mxu0 0
    %200 = vmatpush1.bf16.msra.mxu0 0
    %201 = vmatprep.subr.bf16.mxu0 0
    %202 = vmatpush1.bf16.msra.mxu0 0
    %203 = vmatprep.subr.bf16.mxu0 0
    %204 = vmatpush1.bf16.msra.mxu0 0
    %205 = vmatprep.subr.bf16.mxu0 0
    %206 = vmatpush1.bf16.msra.mxu0 0
    %207 = vmatprep.subr.bf16.mxu0 0
    %208 = vmatpush1.bf16.msra.mxu0 0
    %209 = vmatprep.subr.bf16.mxu0 0
    %210 = vmatpush1.bf16.msra.mxu0 0
    %211 = vmatprep.subr.bf16.mxu0 0
    %212 = vmatpush1.bf16.msra.mxu0 0
    %213 = vmatprep.subr.bf16.mxu0 0
    %214 = vmatpush1.bf16.msra.mxu0 0
    %215 = vmatprep.subr.bf16.mxu0 0
    %216 = vmatpush1.bf16.msra.mxu0 0
    %217 = vmatprep.subr.bf16.mxu0 0
    %218 = vmatpush1.bf16.msra.mxu0 0
    %219 = vmatprep.subr.bf16.mxu0 0
    %220 = vmatpush1.bf16.msra.mxu0 0
    %221 = vmatprep.mubr.bf16.mxu0 0
    %222 = vmatmul.mubr.bf16.gmra.mrb[0].mxu0 %v187
    %v223 = vpop.f32.mrb[0].mxu0
    %v224 = vadd.f32 %v128, %v223
    %v225 = vpop.f32.mrb[0].mxu0
    %v226 = vadd.f32 %v132, %v225
    %v227 = vpop.f32.mrb[0].mxu0
    %v228 = vpop.f32.mrb[0].mxu0
    %229 = vdwg.mxu0
    %230 = vmatprep.subr.bf16.mxu0 %v172
    %231 = vmatpush1.bf16.msra.mxu0 %v171
    %232 = vmatprep.subr.bf16.mxu0 %v176
    %233 = vmatpush1.bf16.msra.mxu0 %v175
    %234 = vmatprep.subr.bf16.mxu0 0
    %235 = vmatpush1.bf16.msra.mxu0 0
    %236 = vmatprep.subr.bf16.mxu0 0
    %237 = vmatpush1.bf16.msra.mxu0 0
    %238 = vmatprep.subr.bf16.mxu0 0
    %239 = vmatpush1.bf16.msra.mxu0 0
    %240 = vmatprep.subr.bf16.mxu0 0
    %241 = vmatpush1.bf16.msra.mxu0 0
    %242 = vmatprep.subr.bf16.mxu0 0
    %243 = vmatpush1.bf16.msra.mxu0 0
    %244 = vmatprep.subr.bf16.mxu0 0
    %245 = vmatpush1.bf16.msra.mxu0 0
    %246 = vmatprep.subr.bf16.mxu0 0
    %247 = vmatpush1.bf16.msra.mxu0 0
    %248 = vmatprep.subr.bf16.mxu0 0
    %249 = vmatpush1.bf16.msra.mxu0 0
    %250 = vmatprep.subr.bf16.mxu0 0
    %251 = vmatpush1.bf16.msra.mxu0 0
    %252 = vmatprep.subr.bf16.mxu0 0
    %253 = vmatpush1.bf16.msra.mxu0 0
    %254 = vmatprep.subr.bf16.mxu0 0
    %255 = vmatpush1.bf16.msra.mxu0 0
    %256 = vmatprep.subr.bf16.mxu0 0
    %257 = vmatpush1.bf16.msra.mxu0 0
    %258 = vmatprep.subr.bf16.mxu0 0
    %259 = vmatpush1.bf16.msra.mxu0 0
    %260 = vmatprep.subr.bf16.mxu0 0
    %261 = vmatpush1.bf16.msra.mxu0 0
    %262 = vmatprep.mubr.bf16.mxu0 0
    %263 = vmatmul.mubr.bf16.gmra.mrb[0].mxu0 %v187
    %v264 = vpop.f32.mrb[0].mxu0
    %v265 = vadd.f32 %v136, %v264
    %v266 = vpop.f32.mrb[0].mxu0
    %v267 = vadd.f32 %v140, %v266
    %v268 = vpop.f32.mrb[0].mxu0
    %v269 = vpop.f32.mrb[0].mxu0
    %270 = vdwg.mxu0
    %s271 = sld [smem:[#allocation2]]
    %vm272 = vcmp.ge.f32.partialorder %v224, 0.0
    %vm273 = vcmp.ge.f32.partialorder %v226, 0.0
    %vm274 = vcmp.ge.f32.partialorder %v265, 0.0
    %vm275 = vcmp.ge.f32.partialorder %v267, 0.0
    %v276 = vstv %s271
    %v277 = vmul.f32 %v276, %v224
    %v278 = vmul.f32 %v276, %v226
    %v279 = vmul.f32 %v276, %v265
    %v280 = vmul.f32 %v276, %v267
    %v281 = vsel %vm272, %v224, %v277
    %v282 = vsel %vm273, %v226, %v278
    %v283 = vsel %vm274, %v265, %v279
    %v284 = vsel %vm275, %v267, %v280
    %v285 = vpack.c.bf16 %v281, %v281
    %v286 = vpack.c.bf16 %v282, %v282
    %v287 = vpack.c.bf16 %v283, %v283
    %v288 = vpack.c.bf16 %v284, %v284
    %v289 = vld [vmem:[#allocation9] sm:$0xff]
    %v290 = vld [vmem:[#allocation9 + $0x8] sm:$0xff]
    %v291 = vld [vmem:[#allocation9 + $0x10] sm:$0xff]
    %v292 = vld [vmem:[#allocation9 + $0x18] sm:$0xff]
    %v293 = vld [vmem:[#allocation9 + $0x20] sm:$0xff]
    %v294 = vld [vmem:[#allocation9 + $0x28] sm:$0xff]
    %v295 = vld [vmem:[#allocation9 + $0x30] sm:$0xff]
    %v296 = vld [vmem:[#allocation9 + $0x38] sm:$0xff]
    %v297 = vld [vmem:[#allocation9 + $0x40] sm:$0xff]
    %v298 = vld [vmem:[#allocation9 + $0x48] sm:$0xff]
    %v299 = vld [vmem:[#allocation9 + $0x50] sm:$0xff]
    %v300 = vld [vmem:[#allocation9 + $0x58] sm:$0xff]
    %v301 = vld [vmem:[#allocation9 + $0x60] sm:$0xff]
    %v302 = vld [vmem:[#allocation9 + $0x68] sm:$0xff]
    %v303 = vld [vmem:[#allocation9 + $0x70] sm:$0xff]
    %v304 = vld [vmem:[#allocation9 + $0x78] sm:$0xff]
    %v305 = vld [vmem:[#allocation9 + $0x80] sm:$0xff]
    %v306 = vld [vmem:[#allocation9 + $0x88] sm:$0xff]
    %v307 = vld [vmem:[#allocation9 + $0x90] sm:$0xff]
    %v308 = vld [vmem:[#allocation9 + $0x98] sm:$0xff]
    %v309 = vld [vmem:[#allocation9 + $0xa0] sm:$0xff]
    %v310 = vld [vmem:[#allocation9 + $0xa8] sm:$0xff]
    %v311 = vld [vmem:[#allocation9 + $0xb0] sm:$0xff]
    %v312 = vld [vmem:[#allocation9 + $0xb8] sm:$0xff]
    %v313 = vld [vmem:[#allocation9 + $0xc0] sm:$0xff]
    %v314 = vld [vmem:[#allocation9 + $0xc8] sm:$0xff]
    %v315 = vld [vmem:[#allocation9 + $0xd0] sm:$0xff]
    %v316 = vld [vmem:[#allocation9 + $0xd8] sm:$0xff]
    %v317 = vld [vmem:[#allocation9 + $0xe0] sm:$0xff]
    %v318 = vld [vmem:[#allocation9 + $0xe8] sm:$0xff]
    %v319 = vld [vmem:[#allocation9 + $0xf0] sm:$0xff]
    %v320 = vld [vmem:[#allocation9 + $0xf8] sm:$0xff]
    %v321 = vld [vmem:[#allocation9 + $0x100] sm:$0xff]
    %v322 = vld [vmem:[#allocation9 + $0x108] sm:$0xff]
    %v323 = vld [vmem:[#allocation9 + $0x110] sm:$0xff]
    %v324 = vld [vmem:[#allocation9 + $0x118] sm:$0xff]
    %v325 = vld [vmem:[#allocation9 + $0x120] sm:$0xff]
    %v326 = vld [vmem:[#allocation9 + $0x128] sm:$0xff]
    %v327 = vld [vmem:[#allocation9 + $0x130] sm:$0xff]
    %v328 = vld [vmem:[#allocation9 + $0x138] sm:$0xff]
    %v329 = vld [vmem:[#allocation9 + $0x140] sm:$0xff]
    %v330 = vld [vmem:[#allocation9 + $0x148] sm:$0xff]
    %v331 = vld [vmem:[#allocation9 + $0x150] sm:$0xff]
    %v332 = vld [vmem:[#allocation9 + $0x158] sm:$0xff]
    %v333 = vld [vmem:[#allocation9 + $0x160] sm:$0xff]
    %v334 = vld [vmem:[#allocation9 + $0x168] sm:$0xff]
    %v335 = vld [vmem:[#allocation9 + $0x170] sm:$0xff]
    %v336 = vld [vmem:[#allocation9 + $0x178] sm:$0xff]
    %v337 = vld [vmem:[#allocation9 + $0x180] sm:$0xff]
    %v338 = vld [vmem:[#allocation9 + $0x188] sm:$0xff]
    %v339 = vld [vmem:[#allocation9 + $0x190] sm:$0xff]
    %v340 = vld [vmem:[#allocation9 + $0x198] sm:$0xff]
    %v341 = vld [vmem:[#allocation9 + $0x1a0] sm:$0xff]
    %v342 = vld [vmem:[#allocation9 + $0x1a8] sm:$0xff]
    %v343 = vld [vmem:[#allocation9 + $0x1b0] sm:$0xff]
    %v344 = vld [vmem:[#allocation9 + $0x1b8] sm:$0xff]
    %v345 = vld [vmem:[#allocation9 + $0x1c0] sm:$0xff]
    %v346 = vld [vmem:[#allocation9 + $0x1c8] sm:$0xff]
    %v347 = vld [vmem:[#allocation9 + $0x1d0] sm:$0xff]
    %v348 = vld [vmem:[#allocation9 + $0x1d8] sm:$0xff]
    %v349 = vld [vmem:[#allocation9 + $0x1e0] sm:$0xff]
    %v350 = vld [vmem:[#allocation9 + $0x1e8] sm:$0xff]
    %v351 = vld [vmem:[#allocation9 + $0x1f0] sm:$0xff]
    %v352 = vld [vmem:[#allocation9 + $0x1f8] sm:$0xff]
    %v353 = vld [vmem:[#allocation9 + $0x200] sm:$0xff]
    %v354 = vld [vmem:[#allocation9 + $0x208] sm:$0xff]
    %v355 = vld [vmem:[#allocation9 + $0x210] sm:$0xff]
    %v356 = vld [vmem:[#allocation9 + $0x218] sm:$0xff]
    %v357 = vld [vmem:[#allocation9 + $0x220] sm:$0xff]
    %v358 = vld [vmem:[#allocation9 + $0x228] sm:$0xff]
    %v359 = vld [vmem:[#allocation9 + $0x230] sm:$0xff]
    %v360 = vld [vmem:[#allocation9 + $0x238] sm:$0xff]
    %v361 = vld [vmem:[#allocation9 + $0x240] sm:$0xff]
    %v362 = vld [vmem:[#allocation9 + $0x248] sm:$0xff]
    %v363 = vld [vmem:[#allocation9 + $0x250] sm:$0xff]
    %v364 = vld [vmem:[#allocation9 + $0x258] sm:$0xff]
    %v365 = vld [vmem:[#allocation9 + $0x260] sm:$0xff]
    %v366 = vld [vmem:[#allocation9 + $0x268] sm:$0xff]
    %v367 = vld [vmem:[#allocation9 + $0x270] sm:$0xff]
    %v368 = vld [vmem:[#allocation9 + $0x278] sm:$0xff]
    %v369 = vld [vmem:[#allocation9 + $0x280] sm:$0xff]
    %v370 = vld [vmem:[#allocation9 + $0x288] sm:$0xff]
    %v371 = vld [vmem:[#allocation9 + $0x290] sm:$0xff]
    %v372 = vld [vmem:[#allocation9 + $0x298] sm:$0xff]
    %v373 = vld [vmem:[#allocation9 + $0x2a0] sm:$0xff]
    %v374 = vld [vmem:[#allocation9 + $0x2a8] sm:$0xff]
    %v375 = vld [vmem:[#allocation9 + $0x2b0] sm:$0xff]
    %v376 = vld [vmem:[#allocation9 + $0x2b8] sm:$0xff]
    %v377 = vld [vmem:[#allocation9 + $0x2c0] sm:$0xff]
    %v378 = vld [vmem:[#allocation9 + $0x2c8] sm:$0xff]
    %v379 = vld [vmem:[#allocation9 + $0x2d0] sm:$0xff]
    %v380 = vld [vmem:[#allocation9 + $0x2d8] sm:$0xff]
    %v381 = vld [vmem:[#allocation9 + $0x2e0] sm:$0xff]
    %v382 = vld [vmem:[#allocation9 + $0x2e8] sm:$0xff]
    %v383 = vld [vmem:[#allocation9 + $0x2f0] sm:$0xff]
    %v384 = vld [vmem:[#allocation9 + $0x2f8] sm:$0xff]
    %v385 = vld [vmem:[#allocation9 + $0x300] sm:$0xff]
    %v386 = vld [vmem:[#allocation9 + $0x308] sm:$0xff]
    %v387 = vld [vmem:[#allocation9 + $0x310] sm:$0xff]
    %v388 = vld [vmem:[#allocation9 + $0x318] sm:$0xff]
    %v389 = vld [vmem:[#allocation9 + $0x320] sm:$0xff]
    %v390 = vld [vmem:[#allocation9 + $0x328] sm:$0xff]
    %v391 = vld [vmem:[#allocation9 + $0x330] sm:$0xff]
    %v392 = vld [vmem:[#allocation9 + $0x338] sm:$0xff]
    %v393 = vld [vmem:[#allocation9 + $0x340] sm:$0xff]
    %v394 = vld [vmem:[#allocation9 + $0x348] sm:$0xff]
    %v395 = vld [vmem:[#allocation9 + $0x350] sm:$0xff]
    %v396 = vld [vmem:[#allocation9 + $0x358] sm:$0xff]
    %v397 = vld [vmem:[#allocation9 + $0x360] sm:$0xff]
    %v398 = vld [vmem:[#allocation9 + $0x368] sm:$0xff]
    %v399 = vld [vmem:[#allocation9 + $0x370] sm:$0xff]
    %v400 = vld [vmem:[#allocation9 + $0x378] sm:$0xff]
    %v401 = vld [vmem:[#allocation9 + $0x380] sm:$0xff]
    %v402 = vld [vmem:[#allocation9 + $0x388] sm:$0xff]
    %v403 = vld [vmem:[#allocation9 + $0x390] sm:$0xff]
    %v404 = vld [vmem:[#allocation9 + $0x398] sm:$0xff]
    %v405 = vld [vmem:[#allocation9 + $0x3a0] sm:$0xff]
    %v406 = vld [vmem:[#allocation9 + $0x3a8] sm:$0xff]
    %v407 = vld [vmem:[#allocation9 + $0x3b0] sm:$0xff]
    %v408 = vld [vmem:[#allocation9 + $0x3b8] sm:$0xff]
    %v409 = vld [vmem:[#allocation9 + $0x3c0] sm:$0xff]
    %v410 = vld [vmem:[#allocation9 + $0x3c8] sm:$0xff]
    %v411 = vld [vmem:[#allocation9 + $0x3d0] sm:$0xff]
    %v412 = vld [vmem:[#allocation9 + $0x3d8] sm:$0xff]
    %v413 = vld [vmem:[#allocation9 + $0x3e0] sm:$0xff]
    %v414 = vld [vmem:[#allocation9 + $0x3e8] sm:$0xff]
    %v415 = vld [vmem:[#allocation9 + $0x3f0] sm:$0xff]
    %v416 = vld [vmem:[#allocation9 + $0x3f8] sm:$0xff]
    %v417 = vld [vmem:[%s5] sm:$0xf]
    %v419 = vlaneseq
    %v420 = vshrl.u32 %v419, 7
    %v421 = vsub.s32 0, %v420
    %v422 = vrot.slane %v417, %v421
    %v423 = vlaneseq
    %v424 = vshrl.u32 %v423, 7
    %v425 = vsub.s32 1, %v424
    %v426 = vrot.slane %v417, %v425
    %v427 = vlaneseq
    %v428 = vshrl.u32 %v427, 7
    %v429 = vsub.s32 2, %v428
    %v430 = vrot.slane %v417, %v429
    %v431 = vlaneseq
    %v432 = vshrl.u32 %v431, 7
    %v433 = vsub.s32 3, %v432
    %v434 = vrot.slane %v417, %v433
    %v567 = vunpack.c.l.b16 %v289
    %v568 = vunpack.c.h.b16 %v289
    %v569 = vunpack.c.l.b16 %v290
    %v570 = vunpack.c.h.b16 %v290
    %v571 = vunpack.c.l.b16 %v291
    %v572 = vunpack.c.h.b16 %v291
    %v573 = vunpack.c.l.b16 %v292
    %v574 = vunpack.c.h.b16 %v292
    %v575 = vunpack.c.l.b16 %v293
    %v576 = vunpack.c.h.b16 %v293
    %v577 = vunpack.c.l.b16 %v294
    %v578 = vunpack.c.h.b16 %v294
    %v579 = vunpack.c.l.b16 %v295
    %v580 = vunpack.c.h.b16 %v295
    %v581 = vunpack.c.l.b16 %v296
    %v582 = vunpack.c.h.b16 %v296
    %v583 = vunpack.c.l.b16 %v297
    %v584 = vunpack.c.h.b16 %v297
    %v585 = vunpack.c.l.b16 %v298
    %v586 = vunpack.c.h.b16 %v298
    %v587 = vunpack.c.l.b16 %v299
    %v588 = vunpack.c.h.b16 %v299
    %v589 = vunpack.c.l.b16 %v300
    %v590 = vunpack.c.h.b16 %v300
    %v591 = vunpack.c.l.b16 %v301
    %v592 = vunpack.c.h.b16 %v301
    %v593 = vunpack.c.l.b16 %v302
    %v594 = vunpack.c.h.b16 %v302
    %v595 = vunpack.c.l.b16 %v303
    %v596 = vunpack.c.h.b16 %v303
    %v597 = vunpack.c.l.b16 %v304
    %v598 = vunpack.c.h.b16 %v304
    %v599 = vunpack.c.l.b16 %v305
    %v600 = vunpack.c.h.b16 %v305
    %v601 = vunpack.c.l.b16 %v306
    %v602 = vunpack.c.h.b16 %v306
    %v603 = vunpack.c.l.b16 %v307
    %v604 = vunpack.c.h.b16 %v307
    %v605 = vunpack.c.l.b16 %v308
    %v606 = vunpack.c.h.b16 %v308
    %v607 = vunpack.c.l.b16 %v309
    %v608 = vunpack.c.h.b16 %v309
    %v609 = vunpack.c.l.b16 %v310
    %v610 = vunpack.c.h.b16 %v310
    %v611 = vunpack.c.l.b16 %v311
    %v612 = vunpack.c.h.b16 %v311
    %v613 = vunpack.c.l.b16 %v312
    %v614 = vunpack.c.h.b16 %v312
    %v615 = vunpack.c.l.b16 %v313
    %v616 = vunpack.c.h.b16 %v313
    %v617 = vunpack.c.l.b16 %v314
    %v618 = vunpack.c.h.b16 %v314
    %v619 = vunpack.c.l.b16 %v315
    %v620 = vunpack.c.h.b16 %v315
    %v621 = vunpack.c.l.b16 %v316
    %v622 = vunpack.c.h.b16 %v316
    %v623 = vunpack.c.l.b16 %v317
    %v624 = vunpack.c.h.b16 %v317
    %v625 = vunpack.c.l.b16 %v318
    %v626 = vunpack.c.h.b16 %v318
    %v627 = vunpack.c.l.b16 %v319
    %v628 = vunpack.c.h.b16 %v319
    %v629 = vunpack.c.l.b16 %v320
    %v630 = vunpack.c.h.b16 %v320
    %v631 = vunpack.c.l.b16 %v321
    %v632 = vunpack.c.h.b16 %v321
    %v633 = vunpack.c.l.b16 %v322
    %v634 = vunpack.c.h.b16 %v322
    %v635 = vunpack.c.l.b16 %v323
    %v636 = vunpack.c.h.b16 %v323
    %v637 = vunpack.c.l.b16 %v324
    %v638 = vunpack.c.h.b16 %v324
    %v639 = vunpack.c.l.b16 %v325
    %v640 = vunpack.c.h.b16 %v325
    %v641 = vunpack.c.l.b16 %v326
    %v642 = vunpack.c.h.b16 %v326
    %v643 = vunpack.c.l.b16 %v327
    %v644 = vunpack.c.h.b16 %v327
    %v645 = vunpack.c.l.b16 %v328
    %v646 = vunpack.c.h.b16 %v328
    %v647 = vunpack.c.l.b16 %v329
    %v648 = vunpack.c.h.b16 %v329
    %v649 = vunpack.c.l.b16 %v330
    %v650 = vunpack.c.h.b16 %v330
    %v651 = vunpack.c.l.b16 %v331
    %v652 = vunpack.c.h.b16 %v331
    %v653 = vunpack.c.l.b16 %v332
    %v654 = vunpack.c.h.b16 %v332
    %v655 = vunpack.c.l.b16 %v333
    %v656 = vunpack.c.h.b16 %v333
    %v657 = vunpack.c.l.b16 %v334
    %v658 = vunpack.c.h.b16 %v334
    %v659 = vunpack.c.l.b16 %v335
    %v660 = vunpack.c.h.b16 %v335
    %v661 = vunpack.c.l.b16 %v336
    %v662 = vunpack.c.h.b16 %v336
    %v663 = vunpack.c.l.b16 %v337
    %v664 = vunpack.c.h.b16 %v337
    %v665 = vunpack.c.l.b16 %v338
    %v666 = vunpack.c.h.b16 %v338
    %v667 = vunpack.c.l.b16 %v339
    %v668 = vunpack.c.h.b16 %v339
    %v669 = vunpack.c.l.b16 %v340
    %v670 = vunpack.c.h.b16 %v340
    %v671 = vunpack.c.l.b16 %v341
    %v672 = vunpack.c.h.b16 %v341
    %v673 = vunpack.c.l.b16 %v342
    %v674 = vunpack.c.h.b16 %v342
    %v675 = vunpack.c.l.b16 %v343
    %v676 = vunpack.c.h.b16 %v343
    %v677 = vunpack.c.l.b16 %v344
    %v678 = vunpack.c.h.b16 %v344
    %v679 = vunpack.c.l.b16 %v345
    %v680 = vunpack.c.h.b16 %v345
    %v681 = vunpack.c.l.b16 %v346
    %v682 = vunpack.c.h.b16 %v346
    %v683 = vunpack.c.l.b16 %v347
    %v684 = vunpack.c.h.b16 %v347
    %v685 = vunpack.c.l.b16 %v348
    %v686 = vunpack.c.h.b16 %v348
    %v687 = vunpack.c.l.b16 %v349
    %v688 = vunpack.c.h.b16 %v349
    %v689 = vunpack.c.l.b16 %v350
    %v690 = vunpack.c.h.b16 %v350
    %v691 = vunpack.c.l.b16 %v351
    %v692 = vunpack.c.h.b16 %v351
    %v693 = vunpack.c.l.b16 %v352
    %v694 = vunpack.c.h.b16 %v352
    %v695 = vunpack.c.l.b16 %v353
    %v696 = vunpack.c.h.b16 %v353
    %v697 = vunpack.c.l.b16 %v354
    %v698 = vunpack.c.h.b16 %v354
    %v699 = vunpack.c.l.b16 %v355
    %v700 = vunpack.c.h.b16 %v355
    %v701 = vunpack.c.l.b16 %v356
    %v702 = vunpack.c.h.b16 %v356
    %v703 = vunpack.c.l.b16 %v357
    %v704 = vunpack.c.h.b16 %v357
    %v705 = vunpack.c.l.b16 %v358
    %v706 = vunpack.c.h.b16 %v358
    %v707 = vunpack.c.l.b16 %v359
    %v708 = vunpack.c.h.b16 %v359
    %v709 = vunpack.c.l.b16 %v360
    %v710 = vunpack.c.h.b16 %v360
    %v711 = vunpack.c.l.b16 %v361
    %v712 = vunpack.c.h.b16 %v361
    %v713 = vunpack.c.l.b16 %v362
    %v714 = vunpack.c.h.b16 %v362
    %v715 = vunpack.c.l.b16 %v363
    %v716 = vunpack.c.h.b16 %v363
    %v717 = vunpack.c.l.b16 %v364
    %v718 = vunpack.c.h.b16 %v364
    %v719 = vunpack.c.l.b16 %v365
    %v720 = vunpack.c.h.b16 %v365
    %v721 = vunpack.c.l.b16 %v366
    %v722 = vunpack.c.h.b16 %v366
    %v723 = vunpack.c.l.b16 %v367
    %v724 = vunpack.c.h.b16 %v367
    %v725 = vunpack.c.l.b16 %v368
    %v726 = vunpack.c.h.b16 %v368
    %v727 = vunpack.c.l.b16 %v369
    %v728 = vunpack.c.h.b16 %v369
    %v729 = vunpack.c.l.b16 %v370
    %v730 = vunpack.c.h.b16 %v370
    %v731 = vunpack.c.l.b16 %v371
    %v732 = vunpack.c.h.b16 %v371
    %v733 = vunpack.c.l.b16 %v372
    %v734 = vunpack.c.h.b16 %v372
    %v735 = vunpack.c.l.b16 %v373
    %v736 = vunpack.c.h.b16 %v373
    %v737 = vunpack.c.l.b16 %v374
    %v738 = vunpack.c.h.b16 %v374
    %v739 = vunpack.c.l.b16 %v375
    %v740 = vunpack.c.h.b16 %v375
    %v741 = vunpack.c.l.b16 %v376
    %v742 = vunpack.c.h.b16 %v376
    %v743 = vunpack.c.l.b16 %v377
    %v744 = vunpack.c.h.b16 %v377
    %v745 = vunpack.c.l.b16 %v378
    %v746 = vunpack.c.h.b16 %v378
    %v747 = vunpack.c.l.b16 %v379
    %v748 = vunpack.c.h.b16 %v379
    %v749 = vunpack.c.l.b16 %v380
    %v750 = vunpack.c.h.b16 %v380
    %v751 = vunpack.c.l.b16 %v381
    %v752 = vunpack.c.h.b16 %v381
    %v753 = vunpack.c.l.b16 %v382
    %v754 = vunpack.c.h.b16 %v382
    %v755 = vunpack.c.l.b16 %v383
    %v756 = vunpack.c.h.b16 %v383
    %v757 = vunpack.c.l.b16 %v384
    %v758 = vunpack.c.h.b16 %v384
    %v759 = vunpack.c.l.b16 %v385
    %v760 = vunpack.c.h.b16 %v385
    %v761 = vunpack.c.l.b16 %v386
    %v762 = vunpack.c.h.b16 %v386
    %v763 = vunpack.c.l.b16 %v387
    %v764 = vunpack.c.h.b16 %v387
    %v765 = vunpack.c.l.b16 %v388
    %v766 = vunpack.c.h.b16 %v388
    %v767 = vunpack.c.l.b16 %v389
    %v768 = vunpack.c.h.b16 %v389
    %v769 = vunpack.c.l.b16 %v390
    %v770 = vunpack.c.h.b16 %v390
    %v771 = vunpack.c.l.b16 %v391
    %v772 = vunpack.c.h.b16 %v391
    %v773 = vunpack.c.l.b16 %v392
    %v774 = vunpack.c.h.b16 %v392
    %v775 = vunpack.c.l.b16 %v393
    %v776 = vunpack.c.h.b16 %v393
    %v777 = vunpack.c.l.b16 %v394
    %v778 = vunpack.c.h.b16 %v394
    %v779 = vunpack.c.l.b16 %v395
    %v780 = vunpack.c.h.b16 %v395
    %v781 = vunpack.c.l.b16 %v396
    %v782 = vunpack.c.h.b16 %v396
    %v783 = vunpack.c.l.b16 %v397
    %v784 = vunpack.c.h.b16 %v397
    %v785 = vunpack.c.l.b16 %v398
    %v786 = vunpack.c.h.b16 %v398
    %v787 = vunpack.c.l.b16 %v399
    %v788 = vunpack.c.h.b16 %v399
    %v789 = vunpack.c.l.b16 %v400
    %v790 = vunpack.c.h.b16 %v400
    %v791 = vunpack.c.l.b16 %v401
    %v792 = vunpack.c.h.b16 %v401
    %v793 = vunpack.c.l.b16 %v402
    %v794 = vunpack.c.h.b16 %v402
    %v795 = vunpack.c.l.b16 %v403
    %v796 = vunpack.c.h.b16 %v403
    %v797 = vunpack.c.l.b16 %v404
    %v798 = vunpack.c.h.b16 %v404
    %v799 = vunpack.c.l.b16 %v405
    %v800 = vunpack.c.h.b16 %v405
    %v801 = vunpack.c.l.b16 %v406
    %v802 = vunpack.c.h.b16 %v406
    %v803 = vunpack.c.l.b16 %v407
    %v804 = vunpack.c.h.b16 %v407
    %v805 = vunpack.c.l.b16 %v408
    %v806 = vunpack.c.h.b16 %v408
    %v807 = vunpack.c.l.b16 %v409
    %v808 = vunpack.c.h.b16 %v409
    %v809 = vunpack.c.l.b16 %v410
    %v810 = vunpack.c.h.b16 %v410
    %v811 = vunpack.c.l.b16 %v411
    %v812 = vunpack.c.h.b16 %v411
    %v813 = vunpack.c.l.b16 %v412
    %v814 = vunpack.c.h.b16 %v412
    %v815 = vunpack.c.l.b16 %v413
    %v816 = vunpack.c.h.b16 %v413
    %v817 = vunpack.c.l.b16 %v414
    %v818 = vunpack.c.h.b16 %v414
    %v819 = vunpack.c.l.b16 %v415
    %v820 = vunpack.c.h.b16 %v415
    %v821 = vunpack.c.l.b16 %v416
    %v822 = vunpack.c.h.b16 %v416
    %v823 = vpack.c.b16 %v571, %v567
    %v824 = vpack.c.b16 %v572, %v568
    %v825 = vpack.c.b16 %v573, %v569
    %v826 = vpack.c.b16 %v574, %v570
    %v827 = vpack.c.b16 %v579, %v575
    %v828 = vpack.c.b16 %v580, %v576
    %v829 = vpack.c.b16 %v581, %v577
    %v830 = vpack.c.b16 %v582, %v578
    %v831 = vpack.c.b16 %v587, %v583
    %v832 = vpack.c.b16 %v588, %v584
    %v833 = vpack.c.b16 %v589, %v585
    %v834 = vpack.c.b16 %v590, %v586
    %v835 = vpack.c.b16 %v595, %v591
    %v836 = vpack.c.b16 %v596, %v592
    %v837 = vpack.c.b16 %v597, %v593
    %v838 = vpack.c.b16 %v598, %v594
    %v839 = vpack.c.b16 %v603, %v599
    %v840 = vpack.c.b16 %v604, %v600
    %v841 = vpack.c.b16 %v605, %v601
    %v842 = vpack.c.b16 %v606, %v602
    %v843 = vpack.c.b16 %v611, %v607
    %v844 = vpack.c.b16 %v612, %v608
    %v845 = vpack.c.b16 %v613, %v609
    %v846 = vpack.c.b16 %v614, %v610
    %v847 = vpack.c.b16 %v619, %v615
    %v848 = vpack.c.b16 %v620, %v616
    %v849 = vpack.c.b16 %v621, %v617
    %v850 = vpack.c.b16 %v622, %v618
    %v851 = vpack.c.b16 %v627, %v623
    %v852 = vpack.c.b16 %v628, %v624
    %v853 = vpack.c.b16 %v629, %v625
    %v854 = vpack.c.b16 %v630, %v626
    %v855 = vpack.c.b16 %v635, %v631
    %v856 = vpack.c.b16 %v636, %v632
    %v857 = vpack.c.b16 %v637, %v633
    %v858 = vpack.c.b16 %v638, %v634
    %v859 = vpack.c.b16 %v643, %v639
    %v860 = vpack.c.b16 %v644, %v640
    %v861 = vpack.c.b16 %v645, %v641
    %v862 = vpack.c.b16 %v646, %v642
    %v863 = vpack.c.b16 %v651, %v647
    %v864 = vpack.c.b16 %v652, %v648
    %v865 = vpack.c.b16 %v653, %v649
    %v866 = vpack.c.b16 %v654, %v650
    %v867 = vpack.c.b16 %v659, %v655
    %v868 = vpack.c.b16 %v660, %v656
    %v869 = vpack.c.b16 %v661, %v657
    %v870 = vpack.c.b16 %v662, %v658
    %v871 = vpack.c.b16 %v667, %v663
    %v872 = vpack.c.b16 %v668, %v664
    %v873 = vpack.c.b16 %v669, %v665
    %v874 = vpack.c.b16 %v670, %v666
    %v875 = vpack.c.b16 %v675, %v671
    %v876 = vpack.c.b16 %v676, %v672
    %v877 = vpack.c.b16 %v677, %v673
    %v878 = vpack.c.b16 %v678, %v674
    %v879 = vpack.c.b16 %v683, %v679
    %v880 = vpack.c.b16 %v684, %v680
    %v881 = vpack.c.b16 %v685, %v681
    %v882 = vpack.c.b16 %v686, %v682
    %v883 = vpack.c.b16 %v691, %v687
    %v884 = vpack.c.b16 %v692, %v688
    %v885 = vpack.c.b16 %v693, %v689
    %v886 = vpack.c.b16 %v694, %v690
    %v887 = vpack.c.b16 %v699, %v695
    %v888 = vpack.c.b16 %v700, %v696
    %v889 = vpack.c.b16 %v701, %v697
    %v890 = vpack.c.b16 %v702, %v698
    %v891 = vpack.c.b16 %v707, %v703
    %v892 = vpack.c.b16 %v708, %v704
    %v893 = vpack.c.b16 %v709, %v705
    %v894 = vpack.c.b16 %v710, %v706
    %v895 = vpack.c.b16 %v715, %v711
    %v896 = vpack.c.b16 %v716, %v712
    %v897 = vpack.c.b16 %v717, %v713
    %v898 = vpack.c.b16 %v718, %v714
    %v899 = vpack.c.b16 %v723, %v719
    %v900 = vpack.c.b16 %v724, %v720
    %v901 = vpack.c.b16 %v725, %v721
    %v902 = vpack.c.b16 %v726, %v722
    %v903 = vpack.c.b16 %v731, %v727
    %v904 = vpack.c.b16 %v732, %v728
    %v905 = vpack.c.b16 %v733, %v729
    %v906 = vpack.c.b16 %v734, %v730
    %v907 = vpack.c.b16 %v739, %v735
    %v908 = vpack.c.b16 %v740, %v736
    %v909 = vpack.c.b16 %v741, %v737
    %v910 = vpack.c.b16 %v742, %v738
    %v911 = vpack.c.b16 %v747, %v743
    %v912 = vpack.c.b16 %v748, %v744
    %v913 = vpack.c.b16 %v749, %v745
    %v914 = vpack.c.b16 %v750, %v746
    %v915 = vpack.c.b16 %v755, %v751
    %v916 = vpack.c.b16 %v756, %v752
    %v917 = vpack.c.b16 %v757, %v753
    %v918 = vpack.c.b16 %v758, %v754
    %v919 = vpack.c.b16 %v763, %v759
    %v920 = vpack.c.b16 %v764, %v760
    %v921 = vpack.c.b16 %v765, %v761
    %v922 = vpack.c.b16 %v766, %v762
    %v923 = vpack.c.b16 %v771, %v767
    %v924 = vpack.c.b16 %v772, %v768
    %v925 = vpack.c.b16 %v773, %v769
    %v926 = vpack.c.b16 %v774, %v770
    %v927 = vpack.c.b16 %v779, %v775
    %v928 = vpack.c.b16 %v780, %v776
    %v929 = vpack.c.b16 %v781, %v777
    %v930 = vpack.c.b16 %v782, %v778
    %v931 = vpack.c.b16 %v787, %v783
    %v932 = vpack.c.b16 %v788, %v784
    %v933 = vpack.c.b16 %v789, %v785
    %v934 = vpack.c.b16 %v790, %v786
    %v935 = vpack.c.b16 %v795, %v791
    %v936 = vpack.c.b16 %v796, %v792
    %v937 = vpack.c.b16 %v797, %v793
    %v938 = vpack.c.b16 %v798, %v794
    %v939 = vpack.c.b16 %v803, %v799
    %v940 = vpack.c.b16 %v804, %v800
    %v941 = vpack.c.b16 %v805, %v801
    %v942 = vpack.c.b16 %v806, %v802
    %v943 = vpack.c.b16 %v811, %v807
    %v944 = vpack.c.b16 %v812, %v808
    %v945 = vpack.c.b16 %v813, %v809
    %v946 = vpack.c.b16 %v814, %v810
    %v947 = vpack.c.b16 %v819, %v815
    %v948 = vpack.c.b16 %v820, %v816
    %v949 = vpack.c.b16 %v821, %v817
    %v950 = vpack.c.b16 %v822, %v818
    %1079 = vmatprep.subr.bf16.mxu0 %v824
    %1080 = vmatpush1.bf16.msra.mxu0 %v823
    %1081 = vmatprep.subr.bf16.mxu0 %v828
    %1082 = vmatpush1.bf16.msra.mxu0 %v827
    %1083 = vmatprep.subr.bf16.mxu0 %v832
    %1084 = vmatpush1.bf16.msra.mxu0 %v831
    %1085 = vmatprep.subr.bf16.mxu0 %v836
    %1086 = vmatpush1.bf16.msra.mxu0 %v835
    %1087 = vmatprep.subr.bf16.mxu0 %v840
    %1088 = vmatpush1.bf16.msra.mxu0 %v839
    %1089 = vmatprep.subr.bf16.mxu0 %v844
    %1090 = vmatpush1.bf16.msra.mxu0 %v843
    %1091 = vmatprep.subr.bf16.mxu0 %v848
    %1092 = vmatpush1.bf16.msra.mxu0 %v847
    %1093 = vmatprep.subr.bf16.mxu0 %v852
    %1094 = vmatpush1.bf16.msra.mxu0 %v851
    %1095 = vmatprep.subr.bf16.mxu0 %v856
    %1096 = vmatpush1.bf16.msra.mxu0 %v855
    %1097 = vmatprep.subr.bf16.mxu0 %v860
    %1098 = vmatpush1.bf16.msra.mxu0 %v859
    %1099 = vmatprep.subr.bf16.mxu0 %v864
    %1100 = vmatpush1.bf16.msra.mxu0 %v863
    %1101 = vmatprep.subr.bf16.mxu0 %v868
    %1102 = vmatpush1.bf16.msra.mxu0 %v867
    %1103 = vmatprep.subr.bf16.mxu0 %v872
    %1104 = vmatpush1.bf16.msra.mxu0 %v871
    %1105 = vmatprep.subr.bf16.mxu0 %v876
    %1106 = vmatpush1.bf16.msra.mxu0 %v875
    %1107 = vmatprep.subr.bf16.mxu0 %v880
    %1108 = vmatpush1.bf16.msra.mxu0 %v879
    %1109 = vmatprep.subr.bf16.mxu0 %v884
    %1110 = vmatpush1.bf16.msra.mxu0 %v883
    %1111 = vmatprep.mubr.bf16.mxu0 %v286
    %1112 = vmatmul.mubr.bf16.gmra.mrb[0].mxu0 %v285
    %v1113 = vpop.f32.mrb[0].mxu0
    %v1114 = vadd.f32 %v422, %v1113
    %v1115 = vpop.f32.mrb[0].mxu0
    %v1116 = vadd.f32 %v426, %v1115
    %v1117 = vpop.f32.mrb[0].mxu0
    %v1118 = vpop.f32.mrb[0].mxu0
    %1119 = vdwg.mxu0
    %1120 = vmatprep.subr.bf16.mxu0 %v888
    %1121 = vmatpush1.bf16.msra.mxu0 %v887
    %1122 = vmatprep.subr.bf16.mxu0 %v892
    %1123 = vmatpush1.bf16.msra.mxu0 %v891
    %1124 = vmatprep.subr.bf16.mxu0 %v896
    %1125 = vmatpush1.bf16.msra.mxu0 %v895
    %1126 = vmatprep.subr.bf16.mxu0 %v900
    %1127 = vmatpush1.bf16.msra.mxu0 %v899
    %1128 = vmatprep.subr.bf16.mxu0 %v904
    %1129 = vmatpush1.bf16.msra.mxu0 %v903
    %1130 = vmatprep.subr.bf16.mxu0 %v908
    %1131 = vmatpush1.bf16.msra.mxu0 %v907
    %1132 = vmatprep.subr.bf16.mxu0 %v912
    %1133 = vmatpush1.bf16.msra.mxu0 %v911
    %1134 = vmatprep.subr.bf16.mxu0 %v916
    %1135 = vmatpush1.bf16.msra.mxu0 %v915
    %1136 = vmatprep.subr.bf16.mxu0 %v920
    %1137 = vmatpush1.bf16.msra.mxu0 %v919
    %1138 = vmatprep.subr.bf16.mxu0 %v924
    %1139 = vmatpush1.bf16.msra.mxu0 %v923
    %1140 = vmatprep.subr.bf16.mxu0 %v928
    %1141 = vmatpush1.bf16.msra.mxu0 %v927
    %1142 = vmatprep.subr.bf16.mxu0 %v932
    %1143 = vmatpush1.bf16.msra.mxu0 %v931
    %1144 = vmatprep.subr.bf16.mxu0 %v936
    %1145 = vmatpush1.bf16.msra.mxu0 %v935
    %1146 = vmatprep.subr.bf16.mxu0 %v940
    %1147 = vmatpush1.bf16.msra.mxu0 %v939
    %1148 = vmatprep.subr.bf16.mxu0 %v944
    %1149 = vmatpush1.bf16.msra.mxu0 %v943
    %1150 = vmatprep.subr.bf16.mxu0 %v948
    %1151 = vmatpush1.bf16.msra.mxu0 %v947
    %1152 = vmatprep.mubr.bf16.mxu0 %v288
    %1153 = vmatmul.mubr.bf16.gmra.mrb[0].mxu0 %v287
    %v1154 = vpop.f32.mrb[0].mxu0
    %v1155 = vadd.f32 %v1114, %v1154
    %v1156 = vpop.f32.mrb[0].mxu0
    %v1157 = vadd.f32 %v1116, %v1156
    %v1158 = vpop.f32.mrb[0].mxu0
    %v1159 = vpop.f32.mrb[0].mxu0
    %1160 = vdwg.mxu0
    %1161 = vmatprep.subr.bf16.mxu0 %v826
    %1162 = vmatpush1.bf16.msra.mxu0 %v825
    %1163 = vmatprep.subr.bf16.mxu0 %v830
    %1164 = vmatpush1.bf16.msra.mxu0 %v829
    %1165 = vmatprep.subr.bf16.mxu0 %v834
    %1166 = vmatpush1.bf16.msra.mxu0 %v833
    %1167 = vmatprep.subr.bf16.mxu0 %v838
    %1168 = vmatpush1.bf16.msra.mxu0 %v837
    %1169 = vmatprep.subr.bf16.mxu0 %v842
    %1170 = vmatpush1.bf16.msra.mxu0 %v841
    %1171 = vmatprep.subr.bf16.mxu0 %v846
    %1172 = vmatpush1.bf16.msra.mxu0 %v845
    %1173 = vmatprep.subr.bf16.mxu0 %v850
    %1174 = vmatpush1.bf16.msra.mxu0 %v849
    %1175 = vmatprep.subr.bf16.mxu0 %v854
    %1176 = vmatpush1.bf16.msra.mxu0 %v853
    %1177 = vmatprep.subr.bf16.mxu0 %v858
    %1178 = vmatpush1.bf16.msra.mxu0 %v857
    %1179 = vmatprep.subr.bf16.mxu0 %v862
    %1180 = vmatpush1.bf16.msra.mxu0 %v861
    %1181 = vmatprep.subr.bf16.mxu0 %v866
    %1182 = vmatpush1.bf16.msra.mxu0 %v865
    %1183 = vmatprep.subr.bf16.mxu0 %v870
    %1184 = vmatpush1.bf16.msra.mxu0 %v869
    %1185 = vmatprep.subr.bf16.mxu0 %v874
    %1186 = vmatpush1.bf16.msra.mxu0 %v873
    %1187 = vmatprep.subr.bf16.mxu0 %v878
    %1188 = vmatpush1.bf16.msra.mxu0 %v877
    %1189 = vmatprep.subr.bf16.mxu0 %v882
    %1190 = vmatpush1.bf16.msra.mxu0 %v881
    %1191 = vmatprep.subr.bf16.mxu0 %v886
    %1192 = vmatpush1.bf16.msra.mxu0 %v885
    %1193 = vmatprep.mubr.bf16.mxu0 %v286
    %1194 = vmatmul.mubr.bf16.gmra.mrb[0].mxu0 %v285
    %v1195 = vpop.f32.mrb[0].mxu0
    %v1196 = vadd.f32 %v430, %v1195
    %v1197 = vpop.f32.mrb[0].mxu0
    %v1198 = vadd.f32 %v434, %v1197
    %v1199 = vpop.f32.mrb[0].mxu0
    %v1200 = vpop.f32.mrb[0].mxu0
    %1201 = vdwg.mxu0
    %1202 = vmatprep.subr.bf16.mxu0 %v890
    %1203 = vmatpush1.bf16.msra.mxu0 %v889
    %1204 = vmatprep.subr.bf16.mxu0 %v894
    %1205 = vmatpush1.bf16.msra.mxu0 %v893
    %1206 = vmatprep.subr.bf16.mxu0 %v898
    %1207 = vmatpush1.bf16.msra.mxu0 %v897
    %1208 = vmatprep.subr.bf16.mxu0 %v902
    %1209 = vmatpush1.bf16.msra.mxu0 %v901
    %1210 = vmatprep.subr.bf16.mxu0 %v906
    %1211 = vmatpush1.bf16.msra.mxu0 %v905
    %1212 = vmatprep.subr.bf16.mxu0 %v910
    %1213 = vmatpush1.bf16.msra.mxu0 %v909
    %1214 = vmatprep.subr.bf16.mxu0 %v914
    %1215 = vmatpush1.bf16.msra.mxu0 %v913
    %1216 = vmatprep.subr.bf16.mxu0 %v918
    %1217 = vmatpush1.bf16.msra.mxu0 %v917
    %1218 = vmatprep.subr.bf16.mxu0 %v922
    %1219 = vmatpush1.bf16.msra.mxu0 %v921
    %1220 = vmatprep.subr.bf16.mxu0 %v926
    %1221 = vmatpush1.bf16.msra.mxu0 %v925
    %1222 = vmatprep.subr.bf16.mxu0 %v930
    %1223 = vmatpush1.bf16.msra.mxu0 %v929
    %1224 = vmatprep.subr.bf16.mxu0 %v934
    %1225 = vmatpush1.bf16.msra.mxu0 %v933
    %1226 = vmatprep.subr.bf16.mxu0 %v938
    %1227 = vmatpush1.bf16.msra.mxu0 %v937
    %1228 = vmatprep.subr.bf16.mxu0 %v942
    %1229 = vmatpush1.bf16.msra.mxu0 %v941
    %1230 = vmatprep.subr.bf16.mxu0 %v946
    %1231 = vmatpush1.bf16.msra.mxu0 %v945
    %1232 = vmatprep.subr.bf16.mxu0 %v950
    %1233 = vmatpush1.bf16.msra.mxu0 %v949
    %1234 = vmatprep.mubr.bf16.mxu0 %v288
    %1235 = vmatmul.mubr.bf16.gmra.mrb[0].mxu0 %v287
    %v1236 = vpop.f32.mrb[0].mxu0
    %v1237 = vadd.f32 %v1196, %v1236
    %v1238 = vpop.f32.mrb[0].mxu0
    %v1239 = vadd.f32 %v1198, %v1238
    %v1240 = vpop.f32.mrb[0].mxu0
    %v1241 = vpop.f32.mrb[0].mxu0
    %1242 = vdwg.mxu0
    %s1243 = sld [smem:[#allocation2 + $0x1]]
    %vm1244 = vcmp.ge.f32.partialorder %v1155, 0.0
    %vm1245 = vcmp.ge.f32.partialorder %v1157, 0.0
    %vm1246 = vcmp.ge.f32.partialorder %v1237, 0.0
    %vm1247 = vcmp.ge.f32.partialorder %v1239, 0.0
    %v1248 = vstv %s1243
    %v1249 = vmul.f32 %v1248, %v1155
    %v1250 = vmul.f32 %v1248, %v1157
    %v1251 = vmul.f32 %v1248, %v1237
    %v1252 = vmul.f32 %v1248, %v1239
    %v1253 = vsel %vm1244, %v1155, %v1249
    %v1254 = vsel %vm1245, %v1157, %v1250
    %v1255 = vsel %vm1246, %v1237, %v1251
    %v1256 = vsel %vm1247, %v1239, %v1252
    %v1257 = vpack.c.bf16 %v1253, %v1253
    %v1258 = vpack.c.bf16 %v1254, %v1254
    %v1259 = vpack.c.bf16 %v1255, %v1255
    %v1260 = vpack.c.bf16 %v1256, %v1256
    %v1261 = vld [vmem:[#allocation10] sm:$0xff]
    %v1262 = vld [vmem:[#allocation10 + $0x8] sm:$0xff]
    %v1263 = vld [vmem:[#allocation10 + $0x10] sm:$0xff]
    %v1264 = vld [vmem:[#allocation10 + $0x18] sm:$0xff]
    %v1265 = vld [vmem:[#allocation10 + $0x20] sm:$0xff]
    %v1266 = vld [vmem:[#allocation10 + $0x28] sm:$0xff]
    %v1267 = vld [vmem:[#allocation10 + $0x30] sm:$0xff]
    %v1268 = vld [vmem:[#allocation10 + $0x38] sm:$0xff]
    %v1269 = vld [vmem:[#allocation10 + $0x40] sm:$0xff]
    %v1270 = vld [vmem:[#allocation10 + $0x48] sm:$0xff]
    %v1271 = vld [vmem:[#allocation10 + $0x50] sm:$0xff]
    %v1272 = vld [vmem:[#allocation10 + $0x58] sm:$0xff]
    %v1273 = vld [vmem:[#allocation10 + $0x60] sm:$0xff]
    %v1274 = vld [vmem:[#allocation10 + $0x68] sm:$0xff]
    %v1275 = vld [vmem:[#allocation10 + $0x70] sm:$0xff]
    %v1276 = vld [vmem:[#allocation10 + $0x78] sm:$0xff]
    %v1277 = vld [vmem:[#allocation10 + $0x80] sm:$0xff]
    %v1278 = vld [vmem:[#allocation10 + $0x88] sm:$0xff]
    %v1279 = vld [vmem:[#allocation10 + $0x90] sm:$0xff]
    %v1280 = vld [vmem:[#allocation10 + $0x98] sm:$0xff]
    %v1281 = vld [vmem:[#allocation10 + $0xa0] sm:$0xff]
    %v1282 = vld [vmem:[#allocation10 + $0xa8] sm:$0xff]
    %v1283 = vld [vmem:[#allocation10 + $0xb0] sm:$0xff]
    %v1284 = vld [vmem:[#allocation10 + $0xb8] sm:$0xff]
    %v1285 = vld [vmem:[#allocation10 + $0xc0] sm:$0xff]
    %v1286 = vld [vmem:[#allocation10 + $0xc8] sm:$0xff]
    %v1287 = vld [vmem:[#allocation10 + $0xd0] sm:$0xff]
    %v1288 = vld [vmem:[#allocation10 + $0xd8] sm:$0xff]
    %v1289 = vld [vmem:[#allocation10 + $0xe0] sm:$0xff]
    %v1290 = vld [vmem:[#allocation10 + $0xe8] sm:$0xff]
    %v1291 = vld [vmem:[#allocation10 + $0xf0] sm:$0xff]
    %v1292 = vld [vmem:[#allocation10 + $0xf8] sm:$0xff]
    %v1293 = vld [vmem:[#allocation10 + $0x100] sm:$0xff]
    %v1294 = vld [vmem:[#allocation10 + $0x108] sm:$0xff]
    %v1295 = vld [vmem:[#allocation10 + $0x110] sm:$0xff]
    %v1296 = vld [vmem:[#allocation10 + $0x118] sm:$0xff]
    %v1297 = vld [vmem:[#allocation10 + $0x120] sm:$0xff]
    %v1298 = vld [vmem:[#allocation10 + $0x128] sm:$0xff]
    %v1299 = vld [vmem:[#allocation10 + $0x130] sm:$0xff]
    %v1300 = vld [vmem:[#allocation10 + $0x138] sm:$0xff]
    %v1301 = vld [vmem:[#allocation10 + $0x140] sm:$0xff]
    %v1302 = vld [vmem:[#allocation10 + $0x148] sm:$0xff]
    %v1303 = vld [vmem:[#allocation10 + $0x150] sm:$0xff]
    %v1304 = vld [vmem:[#allocation10 + $0x158] sm:$0xff]
    %v1305 = vld [vmem:[#allocation10 + $0x160] sm:$0xff]
    %v1306 = vld [vmem:[#allocation10 + $0x168] sm:$0xff]
    %v1307 = vld [vmem:[#allocation10 + $0x170] sm:$0xff]
    %v1308 = vld [vmem:[#allocation10 + $0x178] sm:$0xff]
    %v1309 = vld [vmem:[#allocation10 + $0x180] sm:$0xff]
    %v1310 = vld [vmem:[#allocation10 + $0x188] sm:$0xff]
    %v1311 = vld [vmem:[#allocation10 + $0x190] sm:$0xff]
    %v1312 = vld [vmem:[#allocation10 + $0x198] sm:$0xff]
    %v1313 = vld [vmem:[#allocation10 + $0x1a0] sm:$0xff]
    %v1314 = vld [vmem:[#allocation10 + $0x1a8] sm:$0xff]
    %v1315 = vld [vmem:[#allocation10 + $0x1b0] sm:$0xff]
    %v1316 = vld [vmem:[#allocation10 + $0x1b8] sm:$0xff]
    %v1317 = vld [vmem:[#allocation10 + $0x1c0] sm:$0xff]
    %v1318 = vld [vmem:[#allocation10 + $0x1c8] sm:$0xff]
    %v1319 = vld [vmem:[#allocation10 + $0x1d0] sm:$0xff]
    %v1320 = vld [vmem:[#allocation10 + $0x1d8] sm:$0xff]
    %v1321 = vld [vmem:[#allocation10 + $0x1e0] sm:$0xff]
    %v1322 = vld [vmem:[#allocation10 + $0x1e8] sm:$0xff]
    %v1323 = vld [vmem:[#allocation10 + $0x1f0] sm:$0xff]
    %v1324 = vld [vmem:[#allocation10 + $0x1f8] sm:$0xff]
    %v1325 = vld [vmem:[%s7] sm:$0x3]
    %v1327 = vlaneseq
    %v1328 = vshrl.u32 %v1327, 7
    %v1329 = vsub.s32 0, %v1328
    %v1330 = vrot.slane %v1325, %v1329
    %v1331 = vlaneseq
    %v1332 = vshrl.u32 %v1331, 7
    %v1333 = vsub.s32 1, %v1332
    %v1334 = vrot.slane %v1325, %v1333
    %v1401 = vunpack.c.l.b16 %v1261
    %v1402 = vunpack.c.h.b16 %v1261
    %v1403 = vunpack.c.l.b16 %v1262
    %v1404 = vunpack.c.h.b16 %v1262
    %v1405 = vunpack.c.l.b16 %v1263
    %v1406 = vunpack.c.h.b16 %v1263
    %v1407 = vunpack.c.l.b16 %v1264
    %v1408 = vunpack.c.h.b16 %v1264
    %v1409 = vunpack.c.l.b16 %v1265
    %v1410 = vunpack.c.h.b16 %v1265
    %v1411 = vunpack.c.l.b16 %v1266
    %v1412 = vunpack.c.h.b16 %v1266
    %v1413 = vunpack.c.l.b16 %v1267
    %v1414 = vunpack.c.h.b16 %v1267
    %v1415 = vunpack.c.l.b16 %v1268
    %v1416 = vunpack.c.h.b16 %v1268
    %v1417 = vunpack.c.l.b16 %v1269
    %v1418 = vunpack.c.h.b16 %v1269
    %v1419 = vunpack.c.l.b16 %v1270
    %v1420 = vunpack.c.h.b16 %v1270
    %v1421 = vunpack.c.l.b16 %v1271
    %v1422 = vunpack.c.h.b16 %v1271
    %v1423 = vunpack.c.l.b16 %v1272
    %v1424 = vunpack.c.h.b16 %v1272
    %v1425 = vunpack.c.l.b16 %v1273
    %v1426 = vunpack.c.h.b16 %v1273
    %v1427 = vunpack.c.l.b16 %v1274
    %v1428 = vunpack.c.h.b16 %v1274
    %v1429 = vunpack.c.l.b16 %v1275
    %v1430 = vunpack.c.h.b16 %v1275
    %v1431 = vunpack.c.l.b16 %v1276
    %v1432 = vunpack.c.h.b16 %v1276
    %v1433 = vunpack.c.l.b16 %v1277
    %v1434 = vunpack.c.h.b16 %v1277
    %v1435 = vunpack.c.l.b16 %v1278
    %v1436 = vunpack.c.h.b16 %v1278
    %v1437 = vunpack.c.l.b16 %v1279
    %v1438 = vunpack.c.h.b16 %v1279
    %v1439 = vunpack.c.l.b16 %v1280
    %v1440 = vunpack.c.h.b16 %v1280
    %v1441 = vunpack.c.l.b16 %v1281
    %v1442 = vunpack.c.h.b16 %v1281
    %v1443 = vunpack.c.l.b16 %v1282
    %v1444 = vunpack.c.h.b16 %v1282
    %v1445 = vunpack.c.l.b16 %v1283
    %v1446 = vunpack.c.h.b16 %v1283
    %v1447 = vunpack.c.l.b16 %v1284
    %v1448 = vunpack.c.h.b16 %v1284
    %v1449 = vunpack.c.l.b16 %v1285
    %v1450 = vunpack.c.h.b16 %v1285
    %v1451 = vunpack.c.l.b16 %v1286
    %v1452 = vunpack.c.h.b16 %v1286
    %v1453 = vunpack.c.l.b16 %v1287
    %v1454 = vunpack.c.h.b16 %v1287
    %v1455 = vunpack.c.l.b16 %v1288
    %v1456 = vunpack.c.h.b16 %v1288
    %v1457 = vunpack.c.l.b16 %v1289
    %v1458 = vunpack.c.h.b16 %v1289
    %v1459 = vunpack.c.l.b16 %v1290
    %v1460 = vunpack.c.h.b16 %v1290
    %v1461 = vunpack.c.l.b16 %v1291
    %v1462 = vunpack.c.h.b16 %v1291
    %v1463 = vunpack.c.l.b16 %v1292
    %v1464 = vunpack.c.h.b16 %v1292
    %v1465 = vunpack.c.l.b16 %v1293
    %v1466 = vunpack.c.h.b16 %v1293
    %v1467 = vunpack.c.l.b16 %v1294
    %v1468 = vunpack.c.h.b16 %v1294
    %v1469 = vunpack.c.l.b16 %v1295
    %v1470 = vunpack.c.h.b16 %v1295
    %v1471 = vunpack.c.l.b16 %v1296
    %v1472 = vunpack.c.h.b16 %v1296
    %v1473 = vunpack.c.l.b16 %v1297
    %v1474 = vunpack.c.h.b16 %v1297
    %v1475 = vunpack.c.l.b16 %v1298
    %v1476 = vunpack.c.h.b16 %v1298
    %v1477 = vunpack.c.l.b16 %v1299
    %v1478 = vunpack.c.h.b16 %v1299
    %v1479 = vunpack.c.l.b16 %v1300
    %v1480 = vunpack.c.h.b16 %v1300
    %v1481 = vunpack.c.l.b16 %v1301
    %v1482 = vunpack.c.h.b16 %v1301
    %v1483 = vunpack.c.l.b16 %v1302
    %v1484 = vunpack.c.h.b16 %v1302
    %v1485 = vunpack.c.l.b16 %v1303
    %v1486 = vunpack.c.h.b16 %v1303
    %v1487 = vunpack.c.l.b16 %v1304
    %v1488 = vunpack.c.h.b16 %v1304
    %v1489 = vunpack.c.l.b16 %v1305
    %v1490 = vunpack.c.h.b16 %v1305
    %v1491 = vunpack.c.l.b16 %v1306
    %v1492 = vunpack.c.h.b16 %v1306
    %v1493 = vunpack.c.l.b16 %v1307
    %v1494 = vunpack.c.h.b16 %v1307
    %v1495 = vunpack.c.l.b16 %v1308
    %v1496 = vunpack.c.h.b16 %v1308
    %v1497 = vunpack.c.l.b16 %v1309
    %v1498 = vunpack.c.h.b16 %v1309
    %v1499 = vunpack.c.l.b16 %v1310
    %v1500 = vunpack.c.h.b16 %v1310
    %v1501 = vunpack.c.l.b16 %v1311
    %v1502 = vunpack.c.h.b16 %v1311
    %v1503 = vunpack.c.l.b16 %v1312
    %v1504 = vunpack.c.h.b16 %v1312
    %v1505 = vunpack.c.l.b16 %v1313
    %v1506 = vunpack.c.h.b16 %v1313
    %v1507 = vunpack.c.l.b16 %v1314
    %v1508 = vunpack.c.h.b16 %v1314
    %v1509 = vunpack.c.l.b16 %v1315
    %v1510 = vunpack.c.h.b16 %v1315
    %v1511 = vunpack.c.l.b16 %v1316
    %v1512 = vunpack.c.h.b16 %v1316
    %v1513 = vunpack.c.l.b16 %v1317
    %v1514 = vunpack.c.h.b16 %v1317
    %v1515 = vunpack.c.l.b16 %v1318
    %v1516 = vunpack.c.h.b16 %v1318
    %v1517 = vunpack.c.l.b16 %v1319
    %v1518 = vunpack.c.h.b16 %v1319
    %v1519 = vunpack.c.l.b16 %v1320
    %v1520 = vunpack.c.h.b16 %v1320
    %v1521 = vunpack.c.l.b16 %v1321
    %v1522 = vunpack.c.h.b16 %v1321
    %v1523 = vunpack.c.l.b16 %v1322
    %v1524 = vunpack.c.h.b16 %v1322
    %v1525 = vunpack.c.l.b16 %v1323
    %v1526 = vunpack.c.h.b16 %v1323
    %v1527 = vunpack.c.l.b16 %v1324
    %v1528 = vunpack.c.h.b16 %v1324
    %v1529 = vpack.c.b16 %v1403, %v1401
    %v1530 = vpack.c.b16 %v1404, %v1402
    %v1531 = vpack.c.b16 %v1407, %v1405
    %v1532 = vpack.c.b16 %v1408, %v1406
    %v1533 = vpack.c.b16 %v1411, %v1409
    %v1534 = vpack.c.b16 %v1412, %v1410
    %v1535 = vpack.c.b16 %v1415, %v1413
    %v1536 = vpack.c.b16 %v1416, %v1414
    %v1537 = vpack.c.b16 %v1419, %v1417
    %v1538 = vpack.c.b16 %v1420, %v1418
    %v1539 = vpack.c.b16 %v1423, %v1421
    %v1540 = vpack.c.b16 %v1424, %v1422
    %v1541 = vpack.c.b16 %v1427, %v1425
    %v1542 = vpack.c.b16 %v1428, %v1426
    %v1543 = vpack.c.b16 %v1431, %v1429
    %v1544 = vpack.c.b16 %v1432, %v1430
    %v1545 = vpack.c.b16 %v1435, %v1433
    %v1546 = vpack.c.b16 %v1436, %v1434
    %v1547 = vpack.c.b16 %v1439, %v1437
    %v1548 = vpack.c.b16 %v1440, %v1438
    %v1549 = vpack.c.b16 %v1443, %v1441
    %v1550 = vpack.c.b16 %v1444, %v1442
    %v1551 = vpack.c.b16 %v1447, %v1445
    %v1552 = vpack.c.b16 %v1448, %v1446
    %v1553 = vpack.c.b16 %v1451, %v1449
    %v1554 = vpack.c.b16 %v1452, %v1450
    %v1555 = vpack.c.b16 %v1455, %v1453
    %v1556 = vpack.c.b16 %v1456, %v1454
    %v1557 = vpack.c.b16 %v1459, %v1457
    %v1558 = vpack.c.b16 %v1460, %v1458
    %v1559 = vpack.c.b16 %v1463, %v1461
    %v1560 = vpack.c.b16 %v1464, %v1462
    %v1561 = vpack.c.b16 %v1467, %v1465
    %v1562 = vpack.c.b16 %v1468, %v1466
    %v1563 = vpack.c.b16 %v1471, %v1469
    %v1564 = vpack.c.b16 %v1472, %v1470
    %v1565 = vpack.c.b16 %v1475, %v1473
    %v1566 = vpack.c.b16 %v1476, %v1474
    %v1567 = vpack.c.b16 %v1479, %v1477
    %v1568 = vpack.c.b16 %v1480, %v1478
    %v1569 = vpack.c.b16 %v1483, %v1481
    %v1570 = vpack.c.b16 %v1484, %v1482
    %v1571 = vpack.c.b16 %v1487, %v1485
    %v1572 = vpack.c.b16 %v1488, %v1486
    %v1573 = vpack.c.b16 %v1491, %v1489
    %v1574 = vpack.c.b16 %v1492, %v1490
    %v1575 = vpack.c.b16 %v1495, %v1493
    %v1576 = vpack.c.b16 %v1496, %v1494
    %v1577 = vpack.c.b16 %v1499, %v1497
    %v1578 = vpack.c.b16 %v1500, %v1498
    %v1579 = vpack.c.b16 %v1503, %v1501
    %v1580 = vpack.c.b16 %v1504, %v1502
    %v1581 = vpack.c.b16 %v1507, %v1505
    %v1582 = vpack.c.b16 %v1508, %v1506
    %v1583 = vpack.c.b16 %v1511, %v1509
    %v1584 = vpack.c.b16 %v1512, %v1510
    %v1585 = vpack.c.b16 %v1515, %v1513
    %v1586 = vpack.c.b16 %v1516, %v1514
    %v1587 = vpack.c.b16 %v1519, %v1517
    %v1588 = vpack.c.b16 %v1520, %v1518
    %v1589 = vpack.c.b16 %v1523, %v1521
    %v1590 = vpack.c.b16 %v1524, %v1522
    %v1591 = vpack.c.b16 %v1527, %v1525
    %v1592 = vpack.c.b16 %v1528, %v1526
    %1657 = vmatprep.subr.bf16.mxu0 %v1530
    %1658 = vmatpush1.bf16.msra.mxu0 %v1529
    %1659 = vmatprep.subr.bf16.mxu0 %v1532
    %1660 = vmatpush1.bf16.msra.mxu0 %v1531
    %1661 = vmatprep.subr.bf16.mxu0 %v1534
    %1662 = vmatpush1.bf16.msra.mxu0 %v1533
    %1663 = vmatprep.subr.bf16.mxu0 %v1536
    %1664 = vmatpush1.bf16.msra.mxu0 %v1535
    %1665 = vmatprep.subr.bf16.mxu0 %v1538
    %1666 = vmatpush1.bf16.msra.mxu0 %v1537
    %1667 = vmatprep.subr.bf16.mxu0 %v1540
    %1668 = vmatpush1.bf16.msra.mxu0 %v1539
    %1669 = vmatprep.subr.bf16.mxu0 %v1542
    %1670 = vmatpush1.bf16.msra.mxu0 %v1541
    %1671 = vmatprep.subr.bf16.mxu0 %v1544
    %1672 = vmatpush1.bf16.msra.mxu0 %v1543
    %1673 = vmatprep.subr.bf16.mxu0 %v1546
    %1674 = vmatpush1.bf16.msra.mxu0 %v1545
    %1675 = vmatprep.subr.bf16.mxu0 %v1548
    %1676 = vmatpush1.bf16.msra.mxu0 %v1547
    %1677 = vmatprep.subr.bf16.mxu0 %v1550
    %1678 = vmatpush1.bf16.msra.mxu0 %v1549
    %1679 = vmatprep.subr.bf16.mxu0 %v1552
    %1680 = vmatpush1.bf16.msra.mxu0 %v1551
    %1681 = vmatprep.subr.bf16.mxu0 %v1554
    %1682 = vmatpush1.bf16.msra.mxu0 %v1553
    %1683 = vmatprep.subr.bf16.mxu0 %v1556
    %1684 = vmatpush1.bf16.msra.mxu0 %v1555
    %1685 = vmatprep.subr.bf16.mxu0 %v1558
    %1686 = vmatpush1.bf16.msra.mxu0 %v1557
    %1687 = vmatprep.subr.bf16.mxu0 %v1560
    %1688 = vmatpush1.bf16.msra.mxu0 %v1559
    %1689 = vmatprep.mubr.bf16.mxu0 %v1258
    %1690 = vmatmul.mubr.bf16.gmra.mrb[0].mxu0 %v1257
    %v1691 = vpop.f32.mrb[0].mxu0
    %v1692 = vadd.f32 %v1330, %v1691
    %v1693 = vpop.f32.mrb[0].mxu0
    %v1694 = vadd.f32 %v1334, %v1693
    %v1695 = vpop.f32.mrb[0].mxu0
    %v1696 = vpop.f32.mrb[0].mxu0
    %1697 = vdwg.mxu0
    %1698 = vmatprep.subr.bf16.mxu0 %v1562
    %1699 = vmatpush1.bf16.msra.mxu0 %v1561
    %1700 = vmatprep.subr.bf16.mxu0 %v1564
    %1701 = vmatpush1.bf16.msra.mxu0 %v1563
    %1702 = vmatprep.subr.bf16.mxu0 %v1566
    %1703 = vmatpush1.bf16.msra.mxu0 %v1565
    %1704 = vmatprep.subr.bf16.mxu0 %v1568
    %1705 = vmatpush1.bf16.msra.mxu0 %v1567
    %1706 = vmatprep.subr.bf16.mxu0 %v1570
    %1707 = vmatpush1.bf16.msra.mxu0 %v1569
    %1708 = vmatprep.subr.bf16.mxu0 %v1572
    %1709 = vmatpush1.bf16.msra.mxu0 %v1571
    %1710 = vmatprep.subr.bf16.mxu0 %v1574
    %1711 = vmatpush1.bf16.msra.mxu0 %v1573
    %1712 = vmatprep.subr.bf16.mxu0 %v1576
    %1713 = vmatpush1.bf16.msra.mxu0 %v1575
    %1714 = vmatprep.subr.bf16.mxu0 %v1578
    %1715 = vmatpush1.bf16.msra.mxu0 %v1577
    %1716 = vmatprep.subr.bf16.mxu0 %v1580
    %1717 = vmatpush1.bf16.msra.mxu0 %v1579
    %1718 = vmatprep.subr.bf16.mxu0 %v1582
    %1719 = vmatpush1.bf16.msra.mxu0 %v1581
    %1720 = vmatprep.subr.bf16.mxu0 %v1584
    %1721 = vmatpush1.bf16.msra.mxu0 %v1583
    %1722 = vmatprep.subr.bf16.mxu0 %v1586
    %1723 = vmatpush1.bf16.msra.mxu0 %v1585
    %1724 = vmatprep.subr.bf16.mxu0 %v1588
    %1725 = vmatpush1.bf16.msra.mxu0 %v1587
    %1726 = vmatprep.subr.bf16.mxu0 %v1590
    %1727 = vmatpush1.bf16.msra.mxu0 %v1589
    %1728 = vmatprep.subr.bf16.mxu0 %v1592
    %1729 = vmatpush1.bf16.msra.mxu0 %v1591
    %1730 = vmatprep.mubr.bf16.mxu0 %v1260
    %1731 = vmatmul.mubr.bf16.gmra.mrb[0].mxu0 %v1259
    %v1732 = vpop.f32.mrb[0].mxu0
    %v1733 = vadd.f32 %v1692, %v1732
    %v1734 = vpop.f32.mrb[0].mxu0
    %v1735 = vadd.f32 %v1694, %v1734
    %v1736 = vpop.f32.mrb[0].mxu0
    %v1737 = vpop.f32.mrb[0].mxu0
    %1738 = vdwg.mxu0
    %s1739 = sld [smem:[#allocation2 + $0x2]]
    %vm1740 = vcmp.ge.f32.partialorder %v1733, 0.0
    %vm1741 = vcmp.ge.f32.partialorder %v1735, 0.0
    %v1742 = vstv %s1739
    %v1743 = vmul.f32 %v1742, %v1733
    %v1744 = vmul.f32 %v1742, %v1735
    %v1745 = vsel %vm1740, %v1733, %v1743
    %v1746 = vsel %vm1741, %v1735, %v1744
    %v1747 = vpack.c.bf16 %v1745, %v1745
    %v1748 = vpack.c.bf16 %v1746, %v1746
    %v1749 = vld [vmem:[#allocation12] sm:$0xf]
    %v1750 = vld [vmem:[#allocation12 + $0x4] sm:$0xf]
    %v1751 = vld [vmem:[#allocation12 + $0x8] sm:$0xf]
    %v1752 = vld [vmem:[#allocation12 + $0xc] sm:$0xf]
    %v1753 = vld [vmem:[#allocation12 + $0x10] sm:$0xf]
    %v1754 = vld [vmem:[#allocation12 + $0x14] sm:$0xf]
    %v1755 = vld [vmem:[#allocation12 + $0x18] sm:$0xf]
    %v1756 = vld [vmem:[#allocation12 + $0x1c] sm:$0xf]
    %v1757 = vld [vmem:[#allocation12 + $0x20] sm:$0xf]
    %v1758 = vld [vmem:[#allocation12 + $0x24] sm:$0xf]
    %v1759 = vld [vmem:[#allocation12 + $0x28] sm:$0xf]
    %v1760 = vld [vmem:[#allocation12 + $0x2c] sm:$0xf]
    %v1761 = vld [vmem:[#allocation12 + $0x30] sm:$0xf]
    %v1762 = vld [vmem:[#allocation12 + $0x34] sm:$0xf]
    %v1763 = vld [vmem:[#allocation12 + $0x38] sm:$0xf]
    %v1764 = vld [vmem:[#allocation12 + $0x3c] sm:$0xf]
    %v1765 = vld [vmem:[#allocation12 + $0x40] sm:$0xf]
    %v1766 = vld [vmem:[#allocation12 + $0x44] sm:$0xf]
    %v1767 = vld [vmem:[#allocation12 + $0x48] sm:$0xf]
    %v1768 = vld [vmem:[#allocation12 + $0x4c] sm:$0xf]
    %v1769 = vld [vmem:[#allocation12 + $0x50] sm:$0xf]
    %v1770 = vld [vmem:[#allocation12 + $0x54] sm:$0xf]
    %v1771 = vld [vmem:[#allocation12 + $0x58] sm:$0xf]
    %v1772 = vld [vmem:[#allocation12 + $0x5c] sm:$0xf]
    %v1773 = vld [vmem:[#allocation12 + $0x60] sm:$0xf]
    %v1774 = vld [vmem:[#allocation12 + $0x64] sm:$0xf]
    %v1775 = vld [vmem:[#allocation12 + $0x68] sm:$0xf]
    %v1776 = vld [vmem:[#allocation12 + $0x6c] sm:$0xf]
    %v1777 = vld [vmem:[#allocation12 + $0x70] sm:$0xf]
    %v1778 = vld [vmem:[#allocation12 + $0x74] sm:$0xf]
    %v1779 = vld [vmem:[#allocation12 + $0x78] sm:$0xf]
    %v1780 = vld [vmem:[#allocation12 + $0x7c] sm:$0xf]
    %v1781 = vld [vmem:[%s9] sm:$0x1]
    %v1783 = vlaneseq
    %v1784 = vshrl.u32 %v1783, 7
    %v1785 = vsub.s32 0, %v1784
    %v1786 = vrot.slane %v1781, %v1785
    %v1820 = vunpack.c.l.b16 %v1749
    %v1821 = vunpack.c.l.b16 %v1750
    %v1822 = vunpack.c.l.b16 %v1751
    %v1823 = vunpack.c.l.b16 %v1752
    %v1824 = vunpack.c.l.b16 %v1753
    %v1825 = vunpack.c.l.b16 %v1754
    %v1826 = vunpack.c.l.b16 %v1755
    %v1827 = vunpack.c.l.b16 %v1756
    %v1828 = vunpack.c.l.b16 %v1757
    %v1829 = vunpack.c.l.b16 %v1758
    %v1830 = vunpack.c.l.b16 %v1759
    %v1831 = vunpack.c.l.b16 %v1760
    %v1832 = vunpack.c.l.b16 %v1761
    %v1833 = vunpack.c.l.b16 %v1762
    %v1834 = vunpack.c.l.b16 %v1763
    %v1835 = vunpack.c.l.b16 %v1764
    %v1836 = vunpack.c.l.b16 %v1765
    %v1837 = vunpack.c.l.b16 %v1766
    %v1838 = vunpack.c.l.b16 %v1767
    %v1839 = vunpack.c.l.b16 %v1768
    %v1840 = vunpack.c.l.b16 %v1769
    %v1841 = vunpack.c.l.b16 %v1770
    %v1842 = vunpack.c.l.b16 %v1771
    %v1843 = vunpack.c.l.b16 %v1772
    %v1844 = vunpack.c.l.b16 %v1773
    %v1845 = vunpack.c.l.b16 %v1774
    %v1846 = vunpack.c.l.b16 %v1775
    %v1847 = vunpack.c.l.b16 %v1776
    %v1848 = vunpack.c.l.b16 %v1777
    %v1849 = vunpack.c.l.b16 %v1778
    %v1850 = vunpack.c.l.b16 %v1779
    %v1851 = vunpack.c.l.b16 %v1780
    %v1852 = vpack.c.b16 %v1821, %v1820
    %v1853 = vpack.c.b16 %v1823, %v1822
    %v1854 = vpack.c.b16 %v1825, %v1824
    %v1855 = vpack.c.b16 %v1827, %v1826
    %v1856 = vpack.c.b16 %v1829, %v1828
    %v1857 = vpack.c.b16 %v1831, %v1830
    %v1858 = vpack.c.b16 %v1833, %v1832
    %v1859 = vpack.c.b16 %v1835, %v1834
    %v1860 = vpack.c.b16 %v1837, %v1836
    %v1861 = vpack.c.b16 %v1839, %v1838
    %v1862 = vpack.c.b16 %v1841, %v1840
    %v1863 = vpack.c.b16 %v1843, %v1842
    %v1864 = vpack.c.b16 %v1845, %v1844
    %v1865 = vpack.c.b16 %v1847, %v1846
    %v1866 = vpack.c.b16 %v1849, %v1848
    %v1867 = vpack.c.b16 %v1851, %v1850
    %1884 = vmatprep.subr.bf16.mxu0 0
    %1885 = vmatpush1.bf16.msra.mxu0 %v1852
    %1886 = vmatprep.subr.bf16.mxu0 0
    %1887 = vmatpush1.bf16.msra.mxu0 %v1853
    %1888 = vmatprep.subr.bf16.mxu0 0
    %1889 = vmatpush1.bf16.msra.mxu0 %v1854
    %1890 = vmatprep.subr.bf16.mxu0 0
    %1891 = vmatpush1.bf16.msra.mxu0 %v1855
    %1892 = vmatprep.subr.bf16.mxu0 0
    %1893 = vmatpush1.bf16.msra.mxu0 %v1856
    %1894 = vmatprep.subr.bf16.mxu0 0
    %1895 = vmatpush1.bf16.msra.mxu0 %v1857
    %1896 = vmatprep.subr.bf16.mxu0 0
    %1897 = vmatpush1.bf16.msra.mxu0 %v1858
    %1898 = vmatprep.subr.bf16.mxu0 0
    %1899 = vmatpush1.bf16.msra.mxu0 %v1859
    %1900 = vmatprep.subr.bf16.mxu0 0
    %1901 = vmatpush1.bf16.msra.mxu0 %v1860
    %1902 = vmatprep.subr.bf16.mxu0 0
    %1903 = vmatpush1.bf16.msra.mxu0 %v1861
    %1904 = vmatprep.subr.bf16.mxu0 0
    %1905 = vmatpush1.bf16.msra.mxu0 %v1862
    %1906 = vmatprep.subr.bf16.mxu0 0
    %1907 = vmatpush1.bf16.msra.mxu0 %v1863
    %1908 = vmatprep.subr.bf16.mxu0 0
    %1909 = vmatpush1.bf16.msra.mxu0 %v1864
    %1910 = vmatprep.subr.bf16.mxu0 0
    %1911 = vmatpush1.bf16.msra.mxu0 %v1865
    %1912 = vmatprep.subr.bf16.mxu0 0
    %1913 = vmatpush1.bf16.msra.mxu0 %v1866
    %1914 = vmatprep.subr.bf16.mxu0 0
    %1915 = vmatpush1.bf16.msra.mxu0 %v1867
    %1916 = vmatprep.mubr.bf16.mxu0 %v1748
    %1917 = vmatmul.mubr.bf16.gmra.mrb[0].mxu0 %v1747
    %v1918 = vpop.f32.mrb[0].mxu0
    %v1919 = vadd.f32 %v1786, %v1918
    %v1920 = vpop.f32.mrb[0].mxu0
    %v1921 = vpop.f32.mrb[0].mxu0
    %v1922 = vpop.f32.mrb[0].mxu0
    %1923 = vdwg.mxu0
    %1924 = vst [vmem:[#allocation13] sm:$0xff] %v1919
    // Predicated region
    $region66: #{tpu_custom_call.1} parent=1 // pred_check
      _
    $region67: #{tpu_custom_call.1} parent=1 // pred_check_branch
      %1926 = sbr.rel (0) target = $region69
    $region68: #{tpu_custom_call.1} parent=1 // pred_region
      %s1928 = ssub.s32 128, 128
      %1929 = vsyncadd [#allocation4], %s1928
      %s1931 = sshll.u32 [#allocation13], 4
      %s1932 = int_to_ptr.vmem [resolvable:$true] %s1931
      %1934 = dma.vmem_to_hbm [thread:$0]  %s1932, 128, %s10, [#allocation4]
    $region69: #{tpu_custom_call.1} parent=1 // pred_fallthru
      _
    // Predicated region
    $region70: #{tpu_custom_call.1} parent=1 // pred_check
      _
    $region71: #{tpu_custom_call.1} parent=1 // pred_check_branch
      %1936 = sbr.rel (0) target = $region73
    $region72: #{tpu_custom_call.1} parent=1 // pred_region
      %1937 = dma.done [#allocation4], 128
    $region73: #{tpu_custom_call.1} parent=1 // pred_fallthru
      _
    %1938 = vsyncpa [#allocation3], 1
    %1939 = vsyncpa [#allocation8], 1
    %1940 = vsyncpa [#allocation11], 1
    %1941 = vsyncpa [#allocation4], 1
    %1942 = vsyncpa [#allocation5], 1

</llo_original>
